<compile_context>
chip_gen: v7x
topology: tpu7x:2x2x1
jax: 0.10.0
libtpu: 0.0.40
codegen_flags: <defaults>
</compile_context>

<pallas_src>
import functools

import jax
import jax.numpy as jnp
import numpy as np
from jax.experimental import pallas as pl
from jax.experimental.pallas import tpu as pltpu

PIECE_DICT = {0: '', 1: '', 2: '', 3: '', 4: '', 5: '', 6: '', 7: '', 8: '',
              9: 'K', 10: 'Q', 11: 'R', 12: 'R', 13: 'B', 14: 'B', 15: 'N', 16: 'N'}
POSITION_DICT = {0: 'a', 1: 'b', 2: 'c', 3: 'd', 4: 'e', 5: 'f', 6: 'g', 7: 'h'}

_BLOCK_B = 256   # positions per grid step (batch tile)
_CH = 8          # positions per inner chunk — bounds vreg pressure in the unrolled loop


def _uci_kernel(logits_ref, boards_ref, out_ref):
    """Per grid step: logits (BB,16) f32, boards (BB,16,64) f32, out (BB,16) i32 packed."""
    BB = logits_ref.shape[0]

    @pl.loop(0, BB // _CH)
    def _(c):
        start = pl.multiple_of(c * _CH, _CH)
        lane16 = jax.lax.broadcasted_iota(jnp.int32, (_CH, 16), 1)
        lane64 = jax.lax.broadcasted_iota(jnp.int32, (_CH, 16, 64), 2)

        move_prob0 = logits_ref[pl.ds(start, _CH), :]             # (CH, 16) f32
        boards_c = boards_ref[pl.ds(start, _CH), :, :]            # (CH, 16, 64) f32

        # Hoisted: first row-major argmax of every piece's 8x8 board (boards are static
        # during the selection loop) — all pieces / positions of the chunk at once.
        rmax = jnp.max(boards_c, axis=-1, keepdims=True)          # (CH, 16, 1)
        flats = jnp.min(jnp.where(boards_c == rmax, lane64, 64),
                        axis=-1)                                  # (CH, 16) i32, first max

        # 16-step piece selection (serial by construction), vectorized over the chunk.
        def body(i, carry):
            move_prob, packed = carry
            mmax = jnp.max(move_prob, axis=1, keepdims=True)                      # (CH, 1)
            piece = jnp.min(jnp.where(move_prob == mmax, lane16, 16),
                            axis=1, keepdims=True)                                # first max
            # One-hot gather of this piece's flat board position (VPU select + XLU sum).
            flat = jnp.sum(jnp.where(lane16 == piece, flats, 0),
                           axis=1, keepdims=True)                                 # (CH, 1)
            # Pack (piece, file=flat//8, rank=flat%8) into one int32.
            code = (piece << 8) | ((flat >> 3) << 4) | (flat & 7)                 # (CH, 1)
            packed = jnp.where(lane16 == i, code, packed)                         # candidate i
            # Mask the chosen RAW logit to -1.0, exactly as the reference.
            move_prob = jnp.where(lane16 == piece, jnp.float32(-1.0), move_prob)
            return move_prob, packed

        _, packed = jax.lax.fori_loop(
            0, 16, body, (move_prob0, jnp.zeros((_CH, 16), jnp.int32)), unroll=True)

        out_ref[pl.ds(start, _CH), :] = packed


@functools.partial(jax.jit, static_argnames=("block_b",))
def _uci_candidates(xb, block_b=_BLOCK_B):
    """xb: (B, 1040) f32. Returns (B, 16) i32, packed (piece<<8)|(file<<4)|(rank)."""
    B = xb.shape[0]
    xb = xb.astype(jnp.float32)

    block_b = max(_CH, _CH * (int(block_b) // _CH))               # multiple of the chunk
    BB = min(block_b, _CH * pl.cdiv(B, _CH))                      # batch tile, multiple of 8
    Bp = BB * pl.cdiv(B, BB)                                      # padded batch

    logits = xb[:, :16]                                           # (B, 16)
    boards = xb[:, 16:].reshape(B, 16, 64)                        # natural layout, no transpose
    if Bp != B:
        logits = jnp.pad(logits, ((0, Bp - B), (0, 0)))
        boards = jnp.pad(boards, ((0, Bp - B), (0, 0), (0, 0)))

    packed = pl.pallas_call(
        _uci_kernel,
        out_shape=jax.ShapeDtypeStruct((Bp, 16), jnp.int32),
        grid_spec=pl.GridSpec(
            grid=(Bp // BB,),
            in_specs=[pl.BlockSpec((BB, 16), lambda b: (b, 0)),
                      pl.BlockSpec((BB, 16, 64), lambda b: (b, 0, 0))],
            out_specs=pl.BlockSpec((BB, 16), lambda b: (b, 0)),
        ),
        compiler_params=pltpu.CompilerParams(dimension_semantics=("parallel",)),
        cost_estimate=pl.CostEstimate(
            flops=Bp * (16 * 64 * 4 + 16 * 16 * 8),
            transcendentals=0,
            bytes_accessed=Bp * (16 * 4 + 16 * 64 * 4 + 16 * 4)),
    )(logits, boards)
    return packed[:B]


def uci_forward(x, original_board=None, legal_moves=()):
    """Equivalent of UniversalChessInterface.forward for a single position.

    x: (1040,) f32. original_board / legal_moves: glue inputs for legality.
    Returns the first candidate SAN string found in `legal_moves`, else 'resign'.
    """
    packed = jax.device_get(_uci_candidates(jnp.reshape(x, (1, -1))))[0]  # (16,) i32
    # TODO(synk): legality check requires a python-chess Board (original_board.legal_moves);
    # no Pallas/tensor equivalent, done as plain Python glue against `legal_moves`.
    for code in packed.tolist():
        pidx, f, r = code >> 8, (code >> 4) & 0xF, code & 0xF
        # Note: flat//8 -> POSITION_DICT / flat%8 -> digit reproduces the original module's
        # (quirky) file/rank mapping.
        san = str(PIECE_DICT[pidx] + POSITION_DICT[f] + str(r))
        if san in legal_moves:
            return san
    return 'resign'


def _uci_candidates_ref(xb):
    """Pure-numpy reference of the numeric hot path (same tie-break / masking semantics)."""
    xb = np.asarray(xb, dtype=np.float32)
    B = xb.shape[0]
    out = np.zeros((B, 16, 3), dtype=np.int32)
    for b in range(B):
        move_prob = xb[b, :16].copy()
        boards = xb[b, 16:].reshape(16, 64)
        for i in range(16):
            p = int(np.argmax(move_prob))          # argmax(softmax(x)) == argmax(x)
            flat = int(np.argmax(boards[p]))       # first row-major max
            out[b, i] = (p, flat // 8, flat % 8)
            move_prob[p] = -1.0                    # raw-logit masking, as in the module
    return out


def _decode(packed):
    packed = np.asarray(packed).astype(np.int32)
    return np.stack([packed >> 8, (packed >> 4) & 0xF, packed & 0xF], axis=-1)


if __name__ == "__main__":
    key = jax.random.PRNGKey(0)
    B = 12  # small demo batch; the kernel tiles up to _BLOCK_B positions per grid step
    xb = jax.random.normal(key, (B, 16 + 16 * 8 * 8), dtype=jnp.float32)
    ref = _uci_candidates_ref(xb)

    # Default tiling (single grid step, 2 inner chunks, padded batch).
    packed = _uci_candidates(xb)
    jax.block_until_ready(packed)
    np.testing.assert_array_equal(_decode(packed), ref)

    # Small batch tile -> multi-step grid (exercises the "parallel" batch axis / megacore path).
    packed2 = _uci_candidates(xb, block_b=8)
    jax.block_until_ready(packed2)
    np.testing.assert_array_equal(_decode(packed2), ref)

    result = uci_forward(xb[0], original_board=None, legal_moves=())
    assert result == 'resign'  # no legal-move list supplied -> reference returns 'resign'
    print("KERNEL_OK")
</pallas_src>

<mosaic_0001>
module attributes {stable_mosaic.version = 11 : i64} {
  func.func @_uci_kernel(%arg0: i32, %arg1: memref<16x16xf32, #tpu.memory_space<vmem>>, %arg2: memref<16x16x64xf32, #tpu.memory_space<vmem>>, %arg3: memref<16x16xi32, #tpu.memory_space<vmem>>) attributes {dimension_semantics = [#tpu.dimension_semantics<parallel>], iteration_bounds = array<i64: 1>, scalar_prefetch = 0 : i64, scratch_operands = 0 : i64, tpu.core_type = #tpu.core_type<tc>, window_params = [{transform_indices = @transform_0, window_bounds = array<i64: 16, 16>}, {transform_indices = @transform_1, window_bounds = array<i64: 16, 16, 64>}, {transform_indices = @transform_2, window_bounds = array<i64: 16, 16>}]} {
    %c0_i32 = arith.constant 0 : i32
    %c2_i32 = arith.constant 2 : i32
    %0 = arith.addi %c0_i32, %c2_i32 : i32
    %c1_i32 = arith.constant 1 : i32
    scf.for %arg4 = %c0_i32 to %0 step %c1_i32  : i32 {
      %c1_i32_1 = arith.constant 1 : i32
      %1 = arith.muli %arg4, %c1_i32_1 : i32
      %c0_i32_2 = arith.constant 0 : i32
      %2 = arith.addi %c0_i32_2, %1 : i32
      %c8_i32 = arith.constant 8 : i32
      %3 = arith.muli %2, %c8_i32 : i32
      %4 = tpu.assume_multiple %3, 8 : i32
      %5 = tpu.iota {dimensions = array<i32: 1>} : vector<8x16xi32>
      %6 = tpu.iota {dimensions = array<i32: 2>} : vector<8x16x64xi32>
      %7 = arith.index_cast %4 : i32 to index
      %c0 = arith.constant 0 : index
      %8 = vector.load %arg1[%7, %c0] : memref<16x16xf32, #tpu.memory_space<vmem>>, vector<8x16xf32>
      %9 = arith.index_cast %4 : i32 to index
      %c0_3 = arith.constant 0 : index
      %c0_4 = arith.constant 0 : index
      %10 = vector.load %arg2[%9, %c0_3, %c0_4] : memref<16x16x64xf32, #tpu.memory_space<vmem>>, vector<8x16x64xf32>
      %cst = arith.constant dense<0xFF800000> : vector<8x16xf32>
      %11 = vector.multi_reduction <maximumf>, %10, %cst [2] : vector<8x16x64xf32> to vector<8x16xf32>
      %12 = vector.shape_cast %11 : vector<8x16xf32> to vector<8x16x1xf32>
      %13 = vector.broadcast %12 : vector<8x16x1xf32> to vector<8x16x64xf32>
      %14 = arith.cmpf oeq, %10, %13 : vector<8x16x64xf32>
      %c64_i32 = arith.constant 64 : i32
      %15 = vector.broadcast %c64_i32 : i32 to vector<8x16x64xi32>
      %16 = arith.select %14, %6, %15 : vector<8x16x64xi1>, vector<8x16x64xi32>
      %cst_5 = arith.constant dense<2147483647> : vector<8x16xi32>
      %17 = vector.multi_reduction <minsi>, %16, %cst_5 [2] : vector<8x16x64xi32> to vector<8x16xi32>
      %c0_i32_6 = arith.constant 0 : i32
      %18 = vector.broadcast %c0_i32_6 : i32 to vector<8x16xi32>
      %c0_i32_7 = arith.constant 0 : i32
      %cst_8 = arith.constant dense<0xFF800000> : vector<8xf32>
      %19 = vector.multi_reduction <maximumf>, %8, %cst_8 [1] : vector<8x16xf32> to vector<8xf32>
      %20 = vector.shape_cast %19 : vector<8xf32> to vector<8x1xf32>
      %21 = vector.broadcast %20 : vector<8x1xf32> to vector<8x16xf32>
      %22 = arith.cmpf oeq, %8, %21 : vector<8x16xf32>
      %c16_i32 = arith.constant 16 : i32
      %23 = vector.broadcast %c16_i32 : i32 to vector<8x16xi32>
      %24 = arith.select %22, %5, %23 : vector<8x16xi1>, vector<8x16xi32>
      %cst_9 = arith.constant dense<2147483647> : vector<8xi32>
      %25 = vector.multi_reduction <minsi>, %24, %cst_9 [1] : vector<8x16xi32> to vector<8xi32>
      %26 = vector.shape_cast %25 : vector<8xi32> to vector<8x1xi32>
      %27 = vector.broadcast %26 : vector<8x1xi32> to vector<8x16xi32>
      %28 = arith.cmpi eq, %5, %27 : vector<8x16xi32>
      %c0_i32_10 = arith.constant 0 : i32
      %29 = vector.broadcast %c0_i32_10 : i32 to vector<8x16xi32>
      %30 = arith.select %28, %17, %29 : vector<8x16xi1>, vector<8x16xi32>
      %cst_11 = arith.constant dense<0> : vector<8xi32>
      %31 = vector.multi_reduction <add>, %30, %cst_11 [1] : vector<8x16xi32> to vector<8xi32>
      %32 = vector.shape_cast %31 : vector<8xi32> to vector<8x1xi32>
      %c8_i32_12 = arith.constant 8 : i32
      %33 = vector.broadcast %c8_i32_12 : i32 to vector<8x1xi32>
      %34 = arith.shli %26, %33 : vector<8x1xi32>
      %c3_i32 = arith.constant 3 : i32
      %35 = vector.broadcast %c3_i32 : i32 to vector<8x1xi32>
      %36 = arith.shrsi %32, %35 : vector<8x1xi32>
      %c4_i32 = arith.constant 4 : i32
      %37 = vector.broadcast %c4_i32 : i32 to vector<8x1xi32>
      %38 = arith.shli %36, %37 : vector<8x1xi32>
      %39 = arith.ori %34, %38 : vector<8x1xi32>
      %c7_i32 = arith.constant 7 : i32
      %40 = vector.broadcast %c7_i32 : i32 to vector<8x1xi32>
      %41 = arith.andi %32, %40 : vector<8x1xi32>
      %42 = arith.ori %39, %41 : vector<8x1xi32>
      %43 = vector.broadcast %c0_i32_7 : i32 to vector<8x16xi32>
      %44 = arith.cmpi eq, %5, %43 : vector<8x16xi32>
      %45 = vector.shape_cast %42 : vector<8x1xi32> to vector<8x1xi32>
      %46 = vector.broadcast %45 : vector<8x1xi32> to vector<8x16xi32>
      %47 = arith.select %44, %46, %18 : vector<8x16xi1>, vector<8x16xi32>
      %48 = vector.broadcast %26 : vector<8x1xi32> to vector<8x16xi32>
      %49 = arith.cmpi eq, %5, %48 : vector<8x16xi32>
      %cst_13 = arith.constant -1.000000e+00 : f32
      %50 = vector.broadcast %cst_13 : f32 to vector<8x16xf32>
      %51 = arith.select %49, %50, %8 : vector<8x16xi1>, vector<8x16xf32>
      %c1_i32_14 = arith.constant 1 : i32
      %cst_15 = arith.constant dense<0xFF800000> : vector<8xf32>
      %52 = vector.multi_reduction <maximumf>, %51, %cst_15 [1] : vector<8x16xf32> to vector<8xf32>
      %53 = vector.shape_cast %52 : vector<8xf32> to vector<8x1xf32>
      %54 = vector.broadcast %53 : vector<8x1xf32> to vector<8x16xf32>
      %55 = arith.cmpf oeq, %51, %54 : vector<8x16xf32>
      %c16_i32_16 = arith.constant 16 : i32
      %56 = vector.broadcast %c16_i32_16 : i32 to vector<8x16xi32>
      %57 = arith.select %55, %5, %56 : vector<8x16xi1>, vector<8x16xi32>
      %cst_17 = arith.constant dense<2147483647> : vector<8xi32>
      %58 = vector.multi_reduction <minsi>, %57, %cst_17 [1] : vector<8x16xi32> to vector<8xi32>
      %59 = vector.shape_cast %58 : vector<8xi32> to vector<8x1xi32>
      %60 = vector.broadcast %59 : vector<8x1xi32> to vector<8x16xi32>
      %61 = arith.cmpi eq, %5, %60 : vector<8x16xi32>
      %c0_i32_18 = arith.constant 0 : i32
      %62 = vector.broadcast %c0_i32_18 : i32 to vector<8x16xi32>
      %63 = arith.select %61, %17, %62 : vector<8x16xi1>, vector<8x16xi32>
      %cst_19 = arith.constant dense<0> : vector<8xi32>
      %64 = vector.multi_reduction <add>, %63, %cst_19 [1] : vector<8x16xi32> to vector<8xi32>
      %65 = vector.shape_cast %64 : vector<8xi32> to vector<8x1xi32>
      %c8_i32_20 = arith.constant 8 : i32
      %66 = vector.broadcast %c8_i32_20 : i32 to vector<8x1xi32>
      %67 = arith.shli %59, %66 : vector<8x1xi32>
      %c3_i32_21 = arith.constant 3 : i32
      %68 = vector.broadcast %c3_i32_21 : i32 to vector<8x1xi32>
      %69 = arith.shrsi %65, %68 : vector<8x1xi32>
      %c4_i32_22 = arith.constant 4 : i32
      %70 = vector.broadcast %c4_i32_22 : i32 to vector<8x1xi32>
      %71 = arith.shli %69, %70 : vector<8x1xi32>
      %72 = arith.ori %67, %71 : vector<8x1xi32>
      %c7_i32_23 = arith.constant 7 : i32
      %73 = vector.broadcast %c7_i32_23 : i32 to vector<8x1xi32>
      %74 = arith.andi %65, %73 : vector<8x1xi32>
      %75 = arith.ori %72, %74 : vector<8x1xi32>
      %76 = vector.broadcast %c1_i32_14 : i32 to vector<8x16xi32>
      %77 = arith.cmpi eq, %5, %76 : vector<8x16xi32>
      %78 = vector.shape_cast %75 : vector<8x1xi32> to vector<8x1xi32>
      %79 = vector.broadcast %78 : vector<8x1xi32> to vector<8x16xi32>
      %80 = arith.select %77, %79, %47 : vector<8x16xi1>, vector<8x16xi32>
      %81 = vector.broadcast %59 : vector<8x1xi32> to vector<8x16xi32>
      %82 = arith.cmpi eq, %5, %81 : vector<8x16xi32>
      %cst_24 = arith.constant -1.000000e+00 : f32
      %83 = vector.broadcast %cst_24 : f32 to vector<8x16xf32>
      %84 = arith.select %82, %83, %51 : vector<8x16xi1>, vector<8x16xf32>
      %c2_i32_25 = arith.constant 2 : i32
      %cst_26 = arith.constant dense<0xFF800000> : vector<8xf32>
      %85 = vector.multi_reduction <maximumf>, %84, %cst_26 [1] : vector<8x16xf32> to vector<8xf32>
      %86 = vector.shape_cast %85 : vector<8xf32> to vector<8x1xf32>
      %87 = vector.broadcast %86 : vector<8x1xf32> to vector<8x16xf32>
      %88 = arith.cmpf oeq, %84, %87 : vector<8x16xf32>
      %c16_i32_27 = arith.constant 16 : i32
      %89 = vector.broadcast %c16_i32_27 : i32 to vector<8x16xi32>
      %90 = arith.select %88, %5, %89 : vector<8x16xi1>, vector<8x16xi32>
      %cst_28 = arith.constant dense<2147483647> : vector<8xi32>
      %91 = vector.multi_reduction <minsi>, %90, %cst_28 [1] : vector<8x16xi32> to vector<8xi32>
      %92 = vector.shape_cast %91 : vector<8xi32> to vector<8x1xi32>
      %93 = vector.broadcast %92 : vector<8x1xi32> to vector<8x16xi32>
      %94 = arith.cmpi eq, %5, %93 : vector<8x16xi32>
      %c0_i32_29 = arith.constant 0 : i32
      %95 = vector.broadcast %c0_i32_29 : i32 to vector<8x16xi32>
      %96 = arith.select %94, %17, %95 : vector<8x16xi1>, vector<8x16xi32>
      %cst_30 = arith.constant dense<0> : vector<8xi32>
      %97 = vector.multi_reduction <add>, %96, %cst_30 [1] : vector<8x16xi32> to vector<8xi32>
      %98 = vector.shape_cast %97 : vector<8xi32> to vector<8x1xi32>
      %c8_i32_31 = arith.constant 8 : i32
      %99 = vector.broadcast %c8_i32_31 : i32 to vector<8x1xi32>
      %100 = arith.shli %92, %99 : vector<8x1xi32>
      %c3_i32_32 = arith.constant 3 : i32
      %101 = vector.broadcast %c3_i32_32 : i32 to vector<8x1xi32>
      %102 = arith.shrsi %98, %101 : vector<8x1xi32>
      %c4_i32_33 = arith.constant 4 : i32
      %103 = vector.broadcast %c4_i32_33 : i32 to vector<8x1xi32>
      %104 = arith.shli %102, %103 : vector<8x1xi32>
      %105 = arith.ori %100, %104 : vector<8x1xi32>
      %c7_i32_34 = arith.constant 7 : i32
      %106 = vector.broadcast %c7_i32_34 : i32 to vector<8x1xi32>
      %107 = arith.andi %98, %106 : vector<8x1xi32>
      %108 = arith.ori %105, %107 : vector<8x1xi32>
      %109 = vector.broadcast %c2_i32_25 : i32 to vector<8x16xi32>
      %110 = arith.cmpi eq, %5, %109 : vector<8x16xi32>
      %111 = vector.shape_cast %108 : vector<8x1xi32> to vector<8x1xi32>
      %112 = vector.broadcast %111 : vector<8x1xi32> to vector<8x16xi32>
      %113 = arith.select %110, %112, %80 : vector<8x16xi1>, vector<8x16xi32>
      %114 = vector.broadcast %92 : vector<8x1xi32> to vector<8x16xi32>
      %115 = arith.cmpi eq, %5, %114 : vector<8x16xi32>
      %cst_35 = arith.constant -1.000000e+00 : f32
      %116 = vector.broadcast %cst_35 : f32 to vector<8x16xf32>
      %117 = arith.select %115, %116, %84 : vector<8x16xi1>, vector<8x16xf32>
      %c3_i32_36 = arith.constant 3 : i32
      %cst_37 = arith.constant dense<0xFF800000> : vector<8xf32>
      %118 = vector.multi_reduction <maximumf>, %117, %cst_37 [1] : vector<8x16xf32> to vector<8xf32>
      %119 = vector.shape_cast %118 : vector<8xf32> to vector<8x1xf32>
      %120 = vector.broadcast %119 : vector<8x1xf32> to vector<8x16xf32>
      %121 = arith.cmpf oeq, %117, %120 : vector<8x16xf32>
      %c16_i32_38 = arith.constant 16 : i32
      %122 = vector.broadcast %c16_i32_38 : i32 to vector<8x16xi32>
      %123 = arith.select %121, %5, %122 : vector<8x16xi1>, vector<8x16xi32>
      %cst_39 = arith.constant dense<2147483647> : vector<8xi32>
      %124 = vector.multi_reduction <minsi>, %123, %cst_39 [1] : vector<8x16xi32> to vector<8xi32>
      %125 = vector.shape_cast %124 : vector<8xi32> to vector<8x1xi32>
      %126 = vector.broadcast %125 : vector<8x1xi32> to vector<8x16xi32>
      %127 = arith.cmpi eq, %5, %126 : vector<8x16xi32>
      %c0_i32_40 = arith.constant 0 : i32
      %128 = vector.broadcast %c0_i32_40 : i32 to vector<8x16xi32>
      %129 = arith.select %127, %17, %128 : vector<8x16xi1>, vector<8x16xi32>
      %cst_41 = arith.constant dense<0> : vector<8xi32>
      %130 = vector.multi_reduction <add>, %129, %cst_41 [1] : vector<8x16xi32> to vector<8xi32>
      %131 = vector.shape_cast %130 : vector<8xi32> to vector<8x1xi32>
      %c8_i32_42 = arith.constant 8 : i32
      %132 = vector.broadcast %c8_i32_42 : i32 to vector<8x1xi32>
      %133 = arith.shli %125, %132 : vector<8x1xi32>
      %c3_i32_43 = arith.constant 3 : i32
      %134 = vector.broadcast %c3_i32_43 : i32 to vector<8x1xi32>
      %135 = arith.shrsi %131, %134 : vector<8x1xi32>
      %c4_i32_44 = arith.constant 4 : i32
      %136 = vector.broadcast %c4_i32_44 : i32 to vector<8x1xi32>
      %137 = arith.shli %135, %136 : vector<8x1xi32>
      %138 = arith.ori %133, %137 : vector<8x1xi32>
      %c7_i32_45 = arith.constant 7 : i32
      %139 = vector.broadcast %c7_i32_45 : i32 to vector<8x1xi32>
      %140 = arith.andi %131, %139 : vector<8x1xi32>
      %141 = arith.ori %138, %140 : vector<8x1xi32>
      %142 = vector.broadcast %c3_i32_36 : i32 to vector<8x16xi32>
      %143 = arith.cmpi eq, %5, %142 : vector<8x16xi32>
      %144 = vector.shape_cast %141 : vector<8x1xi32> to vector<8x1xi32>
      %145 = vector.broadcast %144 : vector<8x1xi32> to vector<8x16xi32>
      %146 = arith.select %143, %145, %113 : vector<8x16xi1>, vector<8x16xi32>
      %147 = vector.broadcast %125 : vector<8x1xi32> to vector<8x16xi32>
      %148 = arith.cmpi eq, %5, %147 : vector<8x16xi32>
      %cst_46 = arith.constant -1.000000e+00 : f32
      %149 = vector.broadcast %cst_46 : f32 to vector<8x16xf32>
      %150 = arith.select %148, %149, %117 : vector<8x16xi1>, vector<8x16xf32>
      %c4_i32_47 = arith.constant 4 : i32
      %cst_48 = arith.constant dense<0xFF800000> : vector<8xf32>
      %151 = vector.multi_reduction <maximumf>, %150, %cst_48 [1] : vector<8x16xf32> to vector<8xf32>
      %152 = vector.shape_cast %151 : vector<8xf32> to vector<8x1xf32>
      %153 = vector.broadcast %152 : vector<8x1xf32> to vector<8x16xf32>
      %154 = arith.cmpf oeq, %150, %153 : vector<8x16xf32>
      %c16_i32_49 = arith.constant 16 : i32
      %155 = vector.broadcast %c16_i32_49 : i32 to vector<8x16xi32>
      %156 = arith.select %154, %5, %155 : vector<8x16xi1>, vector<8x16xi32>
      %cst_50 = arith.constant dense<2147483647> : vector<8xi32>
      %157 = vector.multi_reduction <minsi>, %156, %cst_50 [1] : vector<8x16xi32> to vector<8xi32>
      %158 = vector.shape_cast %157 : vector<8xi32> to vector<8x1xi32>
      %159 = vector.broadcast %158 : vector<8x1xi32> to vector<8x16xi32>
      %160 = arith.cmpi eq, %5, %159 : vector<8x16xi32>
      %c0_i32_51 = arith.constant 0 : i32
      %161 = vector.broadcast %c0_i32_51 : i32 to vector<8x16xi32>
      %162 = arith.select %160, %17, %161 : vector<8x16xi1>, vector<8x16xi32>
      %cst_52 = arith.constant dense<0> : vector<8xi32>
      %163 = vector.multi_reduction <add>, %162, %cst_52 [1] : vector<8x16xi32> to vector<8xi32>
      %164 = vector.shape_cast %163 : vector<8xi32> to vector<8x1xi32>
      %c8_i32_53 = arith.constant 8 : i32
      %165 = vector.broadcast %c8_i32_53 : i32 to vector<8x1xi32>
      %166 = arith.shli %158, %165 : vector<8x1xi32>
      %c3_i32_54 = arith.constant 3 : i32
      %167 = vector.broadcast %c3_i32_54 : i32 to vector<8x1xi32>
      %168 = arith.shrsi %164, %167 : vector<8x1xi32>
      %c4_i32_55 = arith.constant 4 : i32
      %169 = vector.broadcast %c4_i32_55 : i32 to vector<8x1xi32>
      %170 = arith.shli %168, %169 : vector<8x1xi32>
      %171 = arith.ori %166, %170 : vector<8x1xi32>
      %c7_i32_56 = arith.constant 7 : i32
      %172 = vector.broadcast %c7_i32_56 : i32 to vector<8x1xi32>
      %173 = arith.andi %164, %172 : vector<8x1xi32>
      %174 = arith.ori %171, %173 : vector<8x1xi32>
      %175 = vector.broadcast %c4_i32_47 : i32 to vector<8x16xi32>
      %176 = arith.cmpi eq, %5, %175 : vector<8x16xi32>
      %177 = vector.shape_cast %174 : vector<8x1xi32> to vector<8x1xi32>
      %178 = vector.broadcast %177 : vector<8x1xi32> to vector<8x16xi32>
      %179 = arith.select %176, %178, %146 : vector<8x16xi1>, vector<8x16xi32>
      %180 = vector.broadcast %158 : vector<8x1xi32> to vector<8x16xi32>
      %181 = arith.cmpi eq, %5, %180 : vector<8x16xi32>
      %cst_57 = arith.constant -1.000000e+00 : f32
      %182 = vector.broadcast %cst_57 : f32 to vector<8x16xf32>
      %183 = arith.select %181, %182, %150 : vector<8x16xi1>, vector<8x16xf32>
      %c5_i32 = arith.constant 5 : i32
      %cst_58 = arith.constant dense<0xFF800000> : vector<8xf32>
      %184 = vector.multi_reduction <maximumf>, %183, %cst_58 [1] : vector<8x16xf32> to vector<8xf32>
      %185 = vector.shape_cast %184 : vector<8xf32> to vector<8x1xf32>
      %186 = vector.broadcast %185 : vector<8x1xf32> to vector<8x16xf32>
      %187 = arith.cmpf oeq, %183, %186 : vector<8x16xf32>
      %c16_i32_59 = arith.constant 16 : i32
      %188 = vector.broadcast %c16_i32_59 : i32 to vector<8x16xi32>
      %189 = arith.select %187, %5, %188 : vector<8x16xi1>, vector<8x16xi32>
      %cst_60 = arith.constant dense<2147483647> : vector<8xi32>
      %190 = vector.multi_reduction <minsi>, %189, %cst_60 [1] : vector<8x16xi32> to vector<8xi32>
      %191 = vector.shape_cast %190 : vector<8xi32> to vector<8x1xi32>
      %192 = vector.broadcast %191 : vector<8x1xi32> to vector<8x16xi32>
      %193 = arith.cmpi eq, %5, %192 : vector<8x16xi32>
      %c0_i32_61 = arith.constant 0 : i32
      %194 = vector.broadcast %c0_i32_61 : i32 to vector<8x16xi32>
      %195 = arith.select %193, %17, %194 : vector<8x16xi1>, vector<8x16xi32>
      %cst_62 = arith.constant dense<0> : vector<8xi32>
      %196 = vector.multi_reduction <add>, %195, %cst_62 [1] : vector<8x16xi32> to vector<8xi32>
      %197 = vector.shape_cast %196 : vector<8xi32> to vector<8x1xi32>
      %c8_i32_63 = arith.constant 8 : i32
      %198 = vector.broadcast %c8_i32_63 : i32 to vector<8x1xi32>
      %199 = arith.shli %191, %198 : vector<8x1xi32>
      %c3_i32_64 = arith.constant 3 : i32
      %200 = vector.broadcast %c3_i32_64 : i32 to vector<8x1xi32>
      %201 = arith.shrsi %197, %200 : vector<8x1xi32>
      %c4_i32_65 = arith.constant 4 : i32
      %202 = vector.broadcast %c4_i32_65 : i32 to vector<8x1xi32>
      %203 = arith.shli %201, %202 : vector<8x1xi32>
      %204 = arith.ori %199, %203 : vector<8x1xi32>
      %c7_i32_66 = arith.constant 7 : i32
      %205 = vector.broadcast %c7_i32_66 : i32 to vector<8x1xi32>
      %206 = arith.andi %197, %205 : vector<8x1xi32>
      %207 = arith.ori %204, %206 : vector<8x1xi32>
      %208 = vector.broadcast %c5_i32 : i32 to vector<8x16xi32>
      %209 = arith.cmpi eq, %5, %208 : vector<8x16xi32>
      %210 = vector.shape_cast %207 : vector<8x1xi32> to vector<8x1xi32>
      %211 = vector.broadcast %210 : vector<8x1xi32> to vector<8x16xi32>
      %212 = arith.select %209, %211, %179 : vector<8x16xi1>, vector<8x16xi32>
      %213 = vector.broadcast %191 : vector<8x1xi32> to vector<8x16xi32>
      %214 = arith.cmpi eq, %5, %213 : vector<8x16xi32>
      %cst_67 = arith.constant -1.000000e+00 : f32
      %215 = vector.broadcast %cst_67 : f32 to vector<8x16xf32>
      %216 = arith.select %214, %215, %183 : vector<8x16xi1>, vector<8x16xf32>
      %c6_i32 = arith.constant 6 : i32
      %cst_68 = arith.constant dense<0xFF800000> : vector<8xf32>
      %217 = vector.multi_reduction <maximumf>, %216, %cst_68 [1] : vector<8x16xf32> to vector<8xf32>
      %218 = vector.shape_cast %217 : vector<8xf32> to vector<8x1xf32>
      %219 = vector.broadcast %218 : vector<8x1xf32> to vector<8x16xf32>
      %220 = arith.cmpf oeq, %216, %219 : vector<8x16xf32>
      %c16_i32_69 = arith.constant 16 : i32
      %221 = vector.broadcast %c16_i32_69 : i32 to vector<8x16xi32>
      %222 = arith.select %220, %5, %221 : vector<8x16xi1>, vector<8x16xi32>
      %cst_70 = arith.constant dense<2147483647> : vector<8xi32>
      %223 = vector.multi_reduction <minsi>, %222, %cst_70 [1] : vector<8x16xi32> to vector<8xi32>
      %224 = vector.shape_cast %223 : vector<8xi32> to vector<8x1xi32>
      %225 = vector.broadcast %224 : vector<8x1xi32> to vector<8x16xi32>
      %226 = arith.cmpi eq, %5, %225 : vector<8x16xi32>
      %c0_i32_71 = arith.constant 0 : i32
      %227 = vector.broadcast %c0_i32_71 : i32 to vector<8x16xi32>
      %228 = arith.select %226, %17, %227 : vector<8x16xi1>, vector<8x16xi32>
      %cst_72 = arith.constant dense<0> : vector<8xi32>
      %229 = vector.multi_reduction <add>, %228, %cst_72 [1] : vector<8x16xi32> to vector<8xi32>
      %230 = vector.shape_cast %229 : vector<8xi32> to vector<8x1xi32>
      %c8_i32_73 = arith.constant 8 : i32
      %231 = vector.broadcast %c8_i32_73 : i32 to vector<8x1xi32>
      %232 = arith.shli %224, %231 : vector<8x1xi32>
      %c3_i32_74 = arith.constant 3 : i32
      %233 = vector.broadcast %c3_i32_74 : i32 to vector<8x1xi32>
      %234 = arith.shrsi %230, %233 : vector<8x1xi32>
      %c4_i32_75 = arith.constant 4 : i32
      %235 = vector.broadcast %c4_i32_75 : i32 to vector<8x1xi32>
      %236 = arith.shli %234, %235 : vector<8x1xi32>
      %237 = arith.ori %232, %236 : vector<8x1xi32>
      %c7_i32_76 = arith.constant 7 : i32
      %238 = vector.broadcast %c7_i32_76 : i32 to vector<8x1xi32>
      %239 = arith.andi %230, %238 : vector<8x1xi32>
      %240 = arith.ori %237, %239 : vector<8x1xi32>
      %241 = vector.broadcast %c6_i32 : i32 to vector<8x16xi32>
      %242 = arith.cmpi eq, %5, %241 : vector<8x16xi32>
      %243 = vector.shape_cast %240 : vector<8x1xi32> to vector<8x1xi32>
      %244 = vector.broadcast %243 : vector<8x1xi32> to vector<8x16xi32>
      %245 = arith.select %242, %244, %212 : vector<8x16xi1>, vector<8x16xi32>
      %246 = vector.broadcast %224 : vector<8x1xi32> to vector<8x16xi32>
      %247 = arith.cmpi eq, %5, %246 : vector<8x16xi32>
      %cst_77 = arith.constant -1.000000e+00 : f32
      %248 = vector.broadcast %cst_77 : f32 to vector<8x16xf32>
      %249 = arith.select %247, %248, %216 : vector<8x16xi1>, vector<8x16xf32>
      %c7_i32_78 = arith.constant 7 : i32
      %cst_79 = arith.constant dense<0xFF800000> : vector<8xf32>
      %250 = vector.multi_reduction <maximumf>, %249, %cst_79 [1] : vector<8x16xf32> to vector<8xf32>
      %251 = vector.shape_cast %250 : vector<8xf32> to vector<8x1xf32>
      %252 = vector.broadcast %251 : vector<8x1xf32> to vector<8x16xf32>
      %253 = arith.cmpf oeq, %249, %252 : vector<8x16xf32>
      %c16_i32_80 = arith.constant 16 : i32
      %254 = vector.broadcast %c16_i32_80 : i32 to vector<8x16xi32>
      %255 = arith.select %253, %5, %254 : vector<8x16xi1>, vector<8x16xi32>
      %cst_81 = arith.constant dense<2147483647> : vector<8xi32>
      %256 = vector.multi_reduction <minsi>, %255, %cst_81 [1] : vector<8x16xi32> to vector<8xi32>
      %257 = vector.shape_cast %256 : vector<8xi32> to vector<8x1xi32>
      %258 = vector.broadcast %257 : vector<8x1xi32> to vector<8x16xi32>
      %259 = arith.cmpi eq, %5, %258 : vector<8x16xi32>
      %c0_i32_82 = arith.constant 0 : i32
      %260 = vector.broadcast %c0_i32_82 : i32 to vector<8x16xi32>
      %261 = arith.select %259, %17, %260 : vector<8x16xi1>, vector<8x16xi32>
      %cst_83 = arith.constant dense<0> : vector<8xi32>
      %262 = vector.multi_reduction <add>, %261, %cst_83 [1] : vector<8x16xi32> to vector<8xi32>
      %263 = vector.shape_cast %262 : vector<8xi32> to vector<8x1xi32>
      %c8_i32_84 = arith.constant 8 : i32
      %264 = vector.broadcast %c8_i32_84 : i32 to vector<8x1xi32>
      %265 = arith.shli %257, %264 : vector<8x1xi32>
      %c3_i32_85 = arith.constant 3 : i32
      %266 = vector.broadcast %c3_i32_85 : i32 to vector<8x1xi32>
      %267 = arith.shrsi %263, %266 : vector<8x1xi32>
      %c4_i32_86 = arith.constant 4 : i32
      %268 = vector.broadcast %c4_i32_86 : i32 to vector<8x1xi32>
      %269 = arith.shli %267, %268 : vector<8x1xi32>
      %270 = arith.ori %265, %269 : vector<8x1xi32>
      %c7_i32_87 = arith.constant 7 : i32
      %271 = vector.broadcast %c7_i32_87 : i32 to vector<8x1xi32>
      %272 = arith.andi %263, %271 : vector<8x1xi32>
      %273 = arith.ori %270, %272 : vector<8x1xi32>
      %274 = vector.broadcast %c7_i32_78 : i32 to vector<8x16xi32>
      %275 = arith.cmpi eq, %5, %274 : vector<8x16xi32>
      %276 = vector.shape_cast %273 : vector<8x1xi32> to vector<8x1xi32>
      %277 = vector.broadcast %276 : vector<8x1xi32> to vector<8x16xi32>
      %278 = arith.select %275, %277, %245 : vector<8x16xi1>, vector<8x16xi32>
      %279 = vector.broadcast %257 : vector<8x1xi32> to vector<8x16xi32>
      %280 = arith.cmpi eq, %5, %279 : vector<8x16xi32>
      %cst_88 = arith.constant -1.000000e+00 : f32
      %281 = vector.broadcast %cst_88 : f32 to vector<8x16xf32>
      %282 = arith.select %280, %281, %249 : vector<8x16xi1>, vector<8x16xf32>
      %c8_i32_89 = arith.constant 8 : i32
      %cst_90 = arith.constant dense<0xFF800000> : vector<8xf32>
      %283 = vector.multi_reduction <maximumf>, %282, %cst_90 [1] : vector<8x16xf32> to vector<8xf32>
      %284 = vector.shape_cast %283 : vector<8xf32> to vector<8x1xf32>
      %285 = vector.broadcast %284 : vector<8x1xf32> to vector<8x16xf32>
      %286 = arith.cmpf oeq, %282, %285 : vector<8x16xf32>
      %c16_i32_91 = arith.constant 16 : i32
      %287 = vector.broadcast %c16_i32_91 : i32 to vector<8x16xi32>
      %288 = arith.select %286, %5, %287 : vector<8x16xi1>, vector<8x16xi32>
      %cst_92 = arith.constant dense<2147483647> : vector<8xi32>
      %289 = vector.multi_reduction <minsi>, %288, %cst_92 [1] : vector<8x16xi32> to vector<8xi32>
      %290 = vector.shape_cast %289 : vector<8xi32> to vector<8x1xi32>
      %291 = vector.broadcast %290 : vector<8x1xi32> to vector<8x16xi32>
      %292 = arith.cmpi eq, %5, %291 : vector<8x16xi32>
      %c0_i32_93 = arith.constant 0 : i32
      %293 = vector.broadcast %c0_i32_93 : i32 to vector<8x16xi32>
      %294 = arith.select %292, %17, %293 : vector<8x16xi1>, vector<8x16xi32>
      %cst_94 = arith.constant dense<0> : vector<8xi32>
      %295 = vector.multi_reduction <add>, %294, %cst_94 [1] : vector<8x16xi32> to vector<8xi32>
      %296 = vector.shape_cast %295 : vector<8xi32> to vector<8x1xi32>
      %c8_i32_95 = arith.constant 8 : i32
      %297 = vector.broadcast %c8_i32_95 : i32 to vector<8x1xi32>
      %298 = arith.shli %290, %297 : vector<8x1xi32>
      %c3_i32_96 = arith.constant 3 : i32
      %299 = vector.broadcast %c3_i32_96 : i32 to vector<8x1xi32>
      %300 = arith.shrsi %296, %299 : vector<8x1xi32>
      %c4_i32_97 = arith.constant 4 : i32
      %301 = vector.broadcast %c4_i32_97 : i32 to vector<8x1xi32>
      %302 = arith.shli %300, %301 : vector<8x1xi32>
      %303 = arith.ori %298, %302 : vector<8x1xi32>
      %c7_i32_98 = arith.constant 7 : i32
      %304 = vector.broadcast %c7_i32_98 : i32 to vector<8x1xi32>
      %305 = arith.andi %296, %304 : vector<8x1xi32>
      %306 = arith.ori %303, %305 : vector<8x1xi32>
      %307 = vector.broadcast %c8_i32_89 : i32 to vector<8x16xi32>
      %308 = arith.cmpi eq, %5, %307 : vector<8x16xi32>
      %309 = vector.shape_cast %306 : vector<8x1xi32> to vector<8x1xi32>
      %310 = vector.broadcast %309 : vector<8x1xi32> to vector<8x16xi32>
      %311 = arith.select %308, %310, %278 : vector<8x16xi1>, vector<8x16xi32>
      %312 = vector.broadcast %290 : vector<8x1xi32> to vector<8x16xi32>
      %313 = arith.cmpi eq, %5, %312 : vector<8x16xi32>
      %cst_99 = arith.constant -1.000000e+00 : f32
      %314 = vector.broadcast %cst_99 : f32 to vector<8x16xf32>
      %315 = arith.select %313, %314, %282 : vector<8x16xi1>, vector<8x16xf32>
      %c9_i32 = arith.constant 9 : i32
      %cst_100 = arith.constant dense<0xFF800000> : vector<8xf32>
      %316 = vector.multi_reduction <maximumf>, %315, %cst_100 [1] : vector<8x16xf32> to vector<8xf32>
      %317 = vector.shape_cast %316 : vector<8xf32> to vector<8x1xf32>
      %318 = vector.broadcast %317 : vector<8x1xf32> to vector<8x16xf32>
      %319 = arith.cmpf oeq, %315, %318 : vector<8x16xf32>
      %c16_i32_101 = arith.constant 16 : i32
      %320 = vector.broadcast %c16_i32_101 : i32 to vector<8x16xi32>
      %321 = arith.select %319, %5, %320 : vector<8x16xi1>, vector<8x16xi32>
      %cst_102 = arith.constant dense<2147483647> : vector<8xi32>
      %322 = vector.multi_reduction <minsi>, %321, %cst_102 [1] : vector<8x16xi32> to vector<8xi32>
      %323 = vector.shape_cast %322 : vector<8xi32> to vector<8x1xi32>
      %324 = vector.broadcast %323 : vector<8x1xi32> to vector<8x16xi32>
      %325 = arith.cmpi eq, %5, %324 : vector<8x16xi32>
      %c0_i32_103 = arith.constant 0 : i32
      %326 = vector.broadcast %c0_i32_103 : i32 to vector<8x16xi32>
      %327 = arith.select %325, %17, %326 : vector<8x16xi1>, vector<8x16xi32>
      %cst_104 = arith.constant dense<0> : vector<8xi32>
      %328 = vector.multi_reduction <add>, %327, %cst_104 [1] : vector<8x16xi32> to vector<8xi32>
      %329 = vector.shape_cast %328 : vector<8xi32> to vector<8x1xi32>
      %c8_i32_105 = arith.constant 8 : i32
      %330 = vector.broadcast %c8_i32_105 : i32 to vector<8x1xi32>
      %331 = arith.shli %323, %330 : vector<8x1xi32>
      %c3_i32_106 = arith.constant 3 : i32
      %332 = vector.broadcast %c3_i32_106 : i32 to vector<8x1xi32>
      %333 = arith.shrsi %329, %332 : vector<8x1xi32>
      %c4_i32_107 = arith.constant 4 : i32
      %334 = vector.broadcast %c4_i32_107 : i32 to vector<8x1xi32>
      %335 = arith.shli %333, %334 : vector<8x1xi32>
      %336 = arith.ori %331, %335 : vector<8x1xi32>
      %c7_i32_108 = arith.constant 7 : i32
      %337 = vector.broadcast %c7_i32_108 : i32 to vector<8x1xi32>
      %338 = arith.andi %329, %337 : vector<8x1xi32>
      %339 = arith.ori %336, %338 : vector<8x1xi32>
      %340 = vector.broadcast %c9_i32 : i32 to vector<8x16xi32>
      %341 = arith.cmpi eq, %5, %340 : vector<8x16xi32>
      %342 = vector.shape_cast %339 : vector<8x1xi32> to vector<8x1xi32>
      %343 = vector.broadcast %342 : vector<8x1xi32> to vector<8x16xi32>
      %344 = arith.select %341, %343, %311 : vector<8x16xi1>, vector<8x16xi32>
      %345 = vector.broadcast %323 : vector<8x1xi32> to vector<8x16xi32>
      %346 = arith.cmpi eq, %5, %345 : vector<8x16xi32>
      %cst_109 = arith.constant -1.000000e+00 : f32
      %347 = vector.broadcast %cst_109 : f32 to vector<8x16xf32>
      %348 = arith.select %346, %347, %315 : vector<8x16xi1>, vector<8x16xf32>
      %c10_i32 = arith.constant 10 : i32
      %cst_110 = arith.constant dense<0xFF800000> : vector<8xf32>
      %349 = vector.multi_reduction <maximumf>, %348, %cst_110 [1] : vector<8x16xf32> to vector<8xf32>
      %350 = vector.shape_cast %349 : vector<8xf32> to vector<8x1xf32>
      %351 = vector.broadcast %350 : vector<8x1xf32> to vector<8x16xf32>
      %352 = arith.cmpf oeq, %348, %351 : vector<8x16xf32>
      %c16_i32_111 = arith.constant 16 : i32
      %353 = vector.broadcast %c16_i32_111 : i32 to vector<8x16xi32>
      %354 = arith.select %352, %5, %353 : vector<8x16xi1>, vector<8x16xi32>
      %cst_112 = arith.constant dense<2147483647> : vector<8xi32>
      %355 = vector.multi_reduction <minsi>, %354, %cst_112 [1] : vector<8x16xi32> to vector<8xi32>
      %356 = vector.shape_cast %355 : vector<8xi32> to vector<8x1xi32>
      %357 = vector.broadcast %356 : vector<8x1xi32> to vector<8x16xi32>
      %358 = arith.cmpi eq, %5, %357 : vector<8x16xi32>
      %c0_i32_113 = arith.constant 0 : i32
      %359 = vector.broadcast %c0_i32_113 : i32 to vector<8x16xi32>
      %360 = arith.select %358, %17, %359 : vector<8x16xi1>, vector<8x16xi32>
      %cst_114 = arith.constant dense<0> : vector<8xi32>
      %361 = vector.multi_reduction <add>, %360, %cst_114 [1] : vector<8x16xi32> to vector<8xi32>
      %362 = vector.shape_cast %361 : vector<8xi32> to vector<8x1xi32>
      %c8_i32_115 = arith.constant 8 : i32
      %363 = vector.broadcast %c8_i32_115 : i32 to vector<8x1xi32>
      %364 = arith.shli %356, %363 : vector<8x1xi32>
      %c3_i32_116 = arith.constant 3 : i32
      %365 = vector.broadcast %c3_i32_116 : i32 to vector<8x1xi32>
      %366 = arith.shrsi %362, %365 : vector<8x1xi32>
      %c4_i32_117 = arith.constant 4 : i32
      %367 = vector.broadcast %c4_i32_117 : i32 to vector<8x1xi32>
      %368 = arith.shli %366, %367 : vector<8x1xi32>
      %369 = arith.ori %364, %368 : vector<8x1xi32>
      %c7_i32_118 = arith.constant 7 : i32
      %370 = vector.broadcast %c7_i32_118 : i32 to vector<8x1xi32>
      %371 = arith.andi %362, %370 : vector<8x1xi32>
      %372 = arith.ori %369, %371 : vector<8x1xi32>
      %373 = vector.broadcast %c10_i32 : i32 to vector<8x16xi32>
      %374 = arith.cmpi eq, %5, %373 : vector<8x16xi32>
      %375 = vector.shape_cast %372 : vector<8x1xi32> to vector<8x1xi32>
      %376 = vector.broadcast %375 : vector<8x1xi32> to vector<8x16xi32>
      %377 = arith.select %374, %376, %344 : vector<8x16xi1>, vector<8x16xi32>
      %378 = vector.broadcast %356 : vector<8x1xi32> to vector<8x16xi32>
      %379 = arith.cmpi eq, %5, %378 : vector<8x16xi32>
      %cst_119 = arith.constant -1.000000e+00 : f32
      %380 = vector.broadcast %cst_119 : f32 to vector<8x16xf32>
      %381 = arith.select %379, %380, %348 : vector<8x16xi1>, vector<8x16xf32>
      %c11_i32 = arith.constant 11 : i32
      %cst_120 = arith.constant dense<0xFF800000> : vector<8xf32>
      %382 = vector.multi_reduction <maximumf>, %381, %cst_120 [1] : vector<8x16xf32> to vector<8xf32>
      %383 = vector.shape_cast %382 : vector<8xf32> to vector<8x1xf32>
      %384 = vector.broadcast %383 : vector<8x1xf32> to vector<8x16xf32>
      %385 = arith.cmpf oeq, %381, %384 : vector<8x16xf32>
      %c16_i32_121 = arith.constant 16 : i32
      %386 = vector.broadcast %c16_i32_121 : i32 to vector<8x16xi32>
      %387 = arith.select %385, %5, %386 : vector<8x16xi1>, vector<8x16xi32>
      %cst_122 = arith.constant dense<2147483647> : vector<8xi32>
      %388 = vector.multi_reduction <minsi>, %387, %cst_122 [1] : vector<8x16xi32> to vector<8xi32>
      %389 = vector.shape_cast %388 : vector<8xi32> to vector<8x1xi32>
      %390 = vector.broadcast %389 : vector<8x1xi32> to vector<8x16xi32>
      %391 = arith.cmpi eq, %5, %390 : vector<8x16xi32>
      %c0_i32_123 = arith.constant 0 : i32
      %392 = vector.broadcast %c0_i32_123 : i32 to vector<8x16xi32>
      %393 = arith.select %391, %17, %392 : vector<8x16xi1>, vector<8x16xi32>
      %cst_124 = arith.constant dense<0> : vector<8xi32>
      %394 = vector.multi_reduction <add>, %393, %cst_124 [1] : vector<8x16xi32> to vector<8xi32>
      %395 = vector.shape_cast %394 : vector<8xi32> to vector<8x1xi32>
      %c8_i32_125 = arith.constant 8 : i32
      %396 = vector.broadcast %c8_i32_125 : i32 to vector<8x1xi32>
      %397 = arith.shli %389, %396 : vector<8x1xi32>
      %c3_i32_126 = arith.constant 3 : i32
      %398 = vector.broadcast %c3_i32_126 : i32 to vector<8x1xi32>
      %399 = arith.shrsi %395, %398 : vector<8x1xi32>
      %c4_i32_127 = arith.constant 4 : i32
      %400 = vector.broadcast %c4_i32_127 : i32 to vector<8x1xi32>
      %401 = arith.shli %399, %400 : vector<8x1xi32>
      %402 = arith.ori %397, %401 : vector<8x1xi32>
      %c7_i32_128 = arith.constant 7 : i32
      %403 = vector.broadcast %c7_i32_128 : i32 to vector<8x1xi32>
      %404 = arith.andi %395, %403 : vector<8x1xi32>
      %405 = arith.ori %402, %404 : vector<8x1xi32>
      %406 = vector.broadcast %c11_i32 : i32 to vector<8x16xi32>
      %407 = arith.cmpi eq, %5, %406 : vector<8x16xi32>
      %408 = vector.shape_cast %405 : vector<8x1xi32> to vector<8x1xi32>
      %409 = vector.broadcast %408 : vector<8x1xi32> to vector<8x16xi32>
      %410 = arith.select %407, %409, %377 : vector<8x16xi1>, vector<8x16xi32>
      %411 = vector.broadcast %389 : vector<8x1xi32> to vector<8x16xi32>
      %412 = arith.cmpi eq, %5, %411 : vector<8x16xi32>
      %cst_129 = arith.constant -1.000000e+00 : f32
      %413 = vector.broadcast %cst_129 : f32 to vector<8x16xf32>
      %414 = arith.select %412, %413, %381 : vector<8x16xi1>, vector<8x16xf32>
      %c12_i32 = arith.constant 12 : i32
      %cst_130 = arith.constant dense<0xFF800000> : vector<8xf32>
      %415 = vector.multi_reduction <maximumf>, %414, %cst_130 [1] : vector<8x16xf32> to vector<8xf32>
      %416 = vector.shape_cast %415 : vector<8xf32> to vector<8x1xf32>
      %417 = vector.broadcast %416 : vector<8x1xf32> to vector<8x16xf32>
      %418 = arith.cmpf oeq, %414, %417 : vector<8x16xf32>
      %c16_i32_131 = arith.constant 16 : i32
      %419 = vector.broadcast %c16_i32_131 : i32 to vector<8x16xi32>
      %420 = arith.select %418, %5, %419 : vector<8x16xi1>, vector<8x16xi32>
      %cst_132 = arith.constant dense<2147483647> : vector<8xi32>
      %421 = vector.multi_reduction <minsi>, %420, %cst_132 [1] : vector<8x16xi32> to vector<8xi32>
      %422 = vector.shape_cast %421 : vector<8xi32> to vector<8x1xi32>
      %423 = vector.broadcast %422 : vector<8x1xi32> to vector<8x16xi32>
      %424 = arith.cmpi eq, %5, %423 : vector<8x16xi32>
      %c0_i32_133 = arith.constant 0 : i32
      %425 = vector.broadcast %c0_i32_133 : i32 to vector<8x16xi32>
      %426 = arith.select %424, %17, %425 : vector<8x16xi1>, vector<8x16xi32>
      %cst_134 = arith.constant dense<0> : vector<8xi32>
      %427 = vector.multi_reduction <add>, %426, %cst_134 [1] : vector<8x16xi32> to vector<8xi32>
      %428 = vector.shape_cast %427 : vector<8xi32> to vector<8x1xi32>
      %c8_i32_135 = arith.constant 8 : i32
      %429 = vector.broadcast %c8_i32_135 : i32 to vector<8x1xi32>
      %430 = arith.shli %422, %429 : vector<8x1xi32>
      %c3_i32_136 = arith.constant 3 : i32
      %431 = vector.broadcast %c3_i32_136 : i32 to vector<8x1xi32>
      %432 = arith.shrsi %428, %431 : vector<8x1xi32>
      %c4_i32_137 = arith.constant 4 : i32
      %433 = vector.broadcast %c4_i32_137 : i32 to vector<8x1xi32>
      %434 = arith.shli %432, %433 : vector<8x1xi32>
      %435 = arith.ori %430, %434 : vector<8x1xi32>
      %c7_i32_138 = arith.constant 7 : i32
      %436 = vector.broadcast %c7_i32_138 : i32 to vector<8x1xi32>
      %437 = arith.andi %428, %436 : vector<8x1xi32>
      %438 = arith.ori %435, %437 : vector<8x1xi32>
      %439 = vector.broadcast %c12_i32 : i32 to vector<8x16xi32>
      %440 = arith.cmpi eq, %5, %439 : vector<8x16xi32>
      %441 = vector.shape_cast %438 : vector<8x1xi32> to vector<8x1xi32>
      %442 = vector.broadcast %441 : vector<8x1xi32> to vector<8x16xi32>
      %443 = arith.select %440, %442, %410 : vector<8x16xi1>, vector<8x16xi32>
      %444 = vector.broadcast %422 : vector<8x1xi32> to vector<8x16xi32>
      %445 = arith.cmpi eq, %5, %444 : vector<8x16xi32>
      %cst_139 = arith.constant -1.000000e+00 : f32
      %446 = vector.broadcast %cst_139 : f32 to vector<8x16xf32>
      %447 = arith.select %445, %446, %414 : vector<8x16xi1>, vector<8x16xf32>
      %c13_i32 = arith.constant 13 : i32
      %cst_140 = arith.constant dense<0xFF800000> : vector<8xf32>
      %448 = vector.multi_reduction <maximumf>, %447, %cst_140 [1] : vector<8x16xf32> to vector<8xf32>
      %449 = vector.shape_cast %448 : vector<8xf32> to vector<8x1xf32>
      %450 = vector.broadcast %449 : vector<8x1xf32> to vector<8x16xf32>
      %451 = arith.cmpf oeq, %447, %450 : vector<8x16xf32>
      %c16_i32_141 = arith.constant 16 : i32
      %452 = vector.broadcast %c16_i32_141 : i32 to vector<8x16xi32>
      %453 = arith.select %451, %5, %452 : vector<8x16xi1>, vector<8x16xi32>
      %cst_142 = arith.constant dense<2147483647> : vector<8xi32>
      %454 = vector.multi_reduction <minsi>, %453, %cst_142 [1] : vector<8x16xi32> to vector<8xi32>
      %455 = vector.shape_cast %454 : vector<8xi32> to vector<8x1xi32>
      %456 = vector.broadcast %455 : vector<8x1xi32> to vector<8x16xi32>
      %457 = arith.cmpi eq, %5, %456 : vector<8x16xi32>
      %c0_i32_143 = arith.constant 0 : i32
      %458 = vector.broadcast %c0_i32_143 : i32 to vector<8x16xi32>
      %459 = arith.select %457, %17, %458 : vector<8x16xi1>, vector<8x16xi32>
      %cst_144 = arith.constant dense<0> : vector<8xi32>
      %460 = vector.multi_reduction <add>, %459, %cst_144 [1] : vector<8x16xi32> to vector<8xi32>
      %461 = vector.shape_cast %460 : vector<8xi32> to vector<8x1xi32>
      %c8_i32_145 = arith.constant 8 : i32
      %462 = vector.broadcast %c8_i32_145 : i32 to vector<8x1xi32>
      %463 = arith.shli %455, %462 : vector<8x1xi32>
      %c3_i32_146 = arith.constant 3 : i32
      %464 = vector.broadcast %c3_i32_146 : i32 to vector<8x1xi32>
      %465 = arith.shrsi %461, %464 : vector<8x1xi32>
      %c4_i32_147 = arith.constant 4 : i32
      %466 = vector.broadcast %c4_i32_147 : i32 to vector<8x1xi32>
      %467 = arith.shli %465, %466 : vector<8x1xi32>
      %468 = arith.ori %463, %467 : vector<8x1xi32>
      %c7_i32_148 = arith.constant 7 : i32
      %469 = vector.broadcast %c7_i32_148 : i32 to vector<8x1xi32>
      %470 = arith.andi %461, %469 : vector<8x1xi32>
      %471 = arith.ori %468, %470 : vector<8x1xi32>
      %472 = vector.broadcast %c13_i32 : i32 to vector<8x16xi32>
      %473 = arith.cmpi eq, %5, %472 : vector<8x16xi32>
      %474 = vector.shape_cast %471 : vector<8x1xi32> to vector<8x1xi32>
      %475 = vector.broadcast %474 : vector<8x1xi32> to vector<8x16xi32>
      %476 = arith.select %473, %475, %443 : vector<8x16xi1>, vector<8x16xi32>
      %477 = vector.broadcast %455 : vector<8x1xi32> to vector<8x16xi32>
      %478 = arith.cmpi eq, %5, %477 : vector<8x16xi32>
      %cst_149 = arith.constant -1.000000e+00 : f32
      %479 = vector.broadcast %cst_149 : f32 to vector<8x16xf32>
      %480 = arith.select %478, %479, %447 : vector<8x16xi1>, vector<8x16xf32>
      %c14_i32 = arith.constant 14 : i32
      %cst_150 = arith.constant dense<0xFF800000> : vector<8xf32>
      %481 = vector.multi_reduction <maximumf>, %480, %cst_150 [1] : vector<8x16xf32> to vector<8xf32>
      %482 = vector.shape_cast %481 : vector<8xf32> to vector<8x1xf32>
      %483 = vector.broadcast %482 : vector<8x1xf32> to vector<8x16xf32>
      %484 = arith.cmpf oeq, %480, %483 : vector<8x16xf32>
      %c16_i32_151 = arith.constant 16 : i32
      %485 = vector.broadcast %c16_i32_151 : i32 to vector<8x16xi32>
      %486 = arith.select %484, %5, %485 : vector<8x16xi1>, vector<8x16xi32>
      %cst_152 = arith.constant dense<2147483647> : vector<8xi32>
      %487 = vector.multi_reduction <minsi>, %486, %cst_152 [1] : vector<8x16xi32> to vector<8xi32>
      %488 = vector.shape_cast %487 : vector<8xi32> to vector<8x1xi32>
      %489 = vector.broadcast %488 : vector<8x1xi32> to vector<8x16xi32>
      %490 = arith.cmpi eq, %5, %489 : vector<8x16xi32>
      %c0_i32_153 = arith.constant 0 : i32
      %491 = vector.broadcast %c0_i32_153 : i32 to vector<8x16xi32>
      %492 = arith.select %490, %17, %491 : vector<8x16xi1>, vector<8x16xi32>
      %cst_154 = arith.constant dense<0> : vector<8xi32>
      %493 = vector.multi_reduction <add>, %492, %cst_154 [1] : vector<8x16xi32> to vector<8xi32>
      %494 = vector.shape_cast %493 : vector<8xi32> to vector<8x1xi32>
      %c8_i32_155 = arith.constant 8 : i32
      %495 = vector.broadcast %c8_i32_155 : i32 to vector<8x1xi32>
      %496 = arith.shli %488, %495 : vector<8x1xi32>
      %c3_i32_156 = arith.constant 3 : i32
      %497 = vector.broadcast %c3_i32_156 : i32 to vector<8x1xi32>
      %498 = arith.shrsi %494, %497 : vector<8x1xi32>
      %c4_i32_157 = arith.constant 4 : i32
      %499 = vector.broadcast %c4_i32_157 : i32 to vector<8x1xi32>
      %500 = arith.shli %498, %499 : vector<8x1xi32>
      %501 = arith.ori %496, %500 : vector<8x1xi32>
      %c7_i32_158 = arith.constant 7 : i32
      %502 = vector.broadcast %c7_i32_158 : i32 to vector<8x1xi32>
      %503 = arith.andi %494, %502 : vector<8x1xi32>
      %504 = arith.ori %501, %503 : vector<8x1xi32>
      %505 = vector.broadcast %c14_i32 : i32 to vector<8x16xi32>
      %506 = arith.cmpi eq, %5, %505 : vector<8x16xi32>
      %507 = vector.shape_cast %504 : vector<8x1xi32> to vector<8x1xi32>
      %508 = vector.broadcast %507 : vector<8x1xi32> to vector<8x16xi32>
      %509 = arith.select %506, %508, %476 : vector<8x16xi1>, vector<8x16xi32>
      %510 = vector.broadcast %488 : vector<8x1xi32> to vector<8x16xi32>
      %511 = arith.cmpi eq, %5, %510 : vector<8x16xi32>
      %cst_159 = arith.constant -1.000000e+00 : f32
      %512 = vector.broadcast %cst_159 : f32 to vector<8x16xf32>
      %513 = arith.select %511, %512, %480 : vector<8x16xi1>, vector<8x16xf32>
      %c15_i32 = arith.constant 15 : i32
      %cst_160 = arith.constant dense<0xFF800000> : vector<8xf32>
      %514 = vector.multi_reduction <maximumf>, %513, %cst_160 [1] : vector<8x16xf32> to vector<8xf32>
      %515 = vector.shape_cast %514 : vector<8xf32> to vector<8x1xf32>
      %516 = vector.broadcast %515 : vector<8x1xf32> to vector<8x16xf32>
      %517 = arith.cmpf oeq, %513, %516 : vector<8x16xf32>
      %c16_i32_161 = arith.constant 16 : i32
      %518 = vector.broadcast %c16_i32_161 : i32 to vector<8x16xi32>
      %519 = arith.select %517, %5, %518 : vector<8x16xi1>, vector<8x16xi32>
      %cst_162 = arith.constant dense<2147483647> : vector<8xi32>
      %520 = vector.multi_reduction <minsi>, %519, %cst_162 [1] : vector<8x16xi32> to vector<8xi32>
      %521 = vector.shape_cast %520 : vector<8xi32> to vector<8x1xi32>
      %522 = vector.broadcast %521 : vector<8x1xi32> to vector<8x16xi32>
      %523 = arith.cmpi eq, %5, %522 : vector<8x16xi32>
      %c0_i32_163 = arith.constant 0 : i32
      %524 = vector.broadcast %c0_i32_163 : i32 to vector<8x16xi32>
      %525 = arith.select %523, %17, %524 : vector<8x16xi1>, vector<8x16xi32>
      %cst_164 = arith.constant dense<0> : vector<8xi32>
      %526 = vector.multi_reduction <add>, %525, %cst_164 [1] : vector<8x16xi32> to vector<8xi32>
      %527 = vector.shape_cast %526 : vector<8xi32> to vector<8x1xi32>
      %c8_i32_165 = arith.constant 8 : i32
      %528 = vector.broadcast %c8_i32_165 : i32 to vector<8x1xi32>
      %529 = arith.shli %521, %528 : vector<8x1xi32>
      %c3_i32_166 = arith.constant 3 : i32
      %530 = vector.broadcast %c3_i32_166 : i32 to vector<8x1xi32>
      %531 = arith.shrsi %527, %530 : vector<8x1xi32>
      %c4_i32_167 = arith.constant 4 : i32
      %532 = vector.broadcast %c4_i32_167 : i32 to vector<8x1xi32>
      %533 = arith.shli %531, %532 : vector<8x1xi32>
      %534 = arith.ori %529, %533 : vector<8x1xi32>
      %c7_i32_168 = arith.constant 7 : i32
      %535 = vector.broadcast %c7_i32_168 : i32 to vector<8x1xi32>
      %536 = arith.andi %527, %535 : vector<8x1xi32>
      %537 = arith.ori %534, %536 : vector<8x1xi32>
      %538 = vector.broadcast %c15_i32 : i32 to vector<8x16xi32>
      %539 = arith.cmpi eq, %5, %538 : vector<8x16xi32>
      %540 = vector.shape_cast %537 : vector<8x1xi32> to vector<8x1xi32>
      %541 = vector.broadcast %540 : vector<8x1xi32> to vector<8x16xi32>
      %542 = arith.select %539, %541, %509 : vector<8x16xi1>, vector<8x16xi32>
      %543 = vector.broadcast %521 : vector<8x1xi32> to vector<8x16xi32>
      %544 = arith.cmpi eq, %5, %543 : vector<8x16xi32>
      %cst_169 = arith.constant -1.000000e+00 : f32
      %545 = vector.broadcast %cst_169 : f32 to vector<8x16xf32>
      %546 = arith.select %544, %545, %513 : vector<8x16xi1>, vector<8x16xf32>
      %c16_i32_170 = arith.constant 16 : i32
      %547 = arith.index_cast %4 : i32 to index
      %c0_171 = arith.constant 0 : index
      %548 = vector.load %arg3[%547, %c0_171] : memref<16x16xi32, #tpu.memory_space<vmem>>, vector<8x16xi32>
      tpu.vector_store %arg3[%547, %c0_171], %542 {strides = array<i32>} : memref<16x16xi32, #tpu.memory_space<vmem>>, vector<8x16xi32>,
    }
    %c2_i32_0 = arith.constant 2 : i32
    return
  }
  func.func @transform_0(%arg0: i32) -> (i32, i32) {
    %c0_i32 = arith.constant 0 : i32
    %c0_i32_0 = arith.constant 0 : i32
    return %arg0, %c0_i32 : i32, i32
  }
  func.func @transform_1(%arg0: i32) -> (i32, i32, i32) {
    %c0_i32 = arith.constant 0 : i32
    %c0_i32_0 = arith.constant 0 : i32
    %c0_i32_1 = arith.constant 0 : i32
    return %arg0, %c0_i32, %c0_i32_0 : i32, i32, i32
  }
  func.func @transform_2(%arg0: i32) -> (i32, i32) {
    %c0_i32 = arith.constant 0 : i32
    %c0_i32_0 = arith.constant 0 : i32
    return %arg0, %c0_i32 : i32, i32
  }
}

</mosaic_0001>

<llo_original>
// kernel: _uci_candidates.1
$region0: #{_uci_candidates.1}
  #allocation0 [shape = 'u32[]', space=smem, size = 0x4, offset = 0x4, fixed_abs, tag = 'smem constant byte address 0x4 - core index']
  #allocation1 [shape = 'u32[144,128]{1,0:T(1,128)}', space=vmem, size = 0x12000, scoped, tag = 'internal scratch']
  %s0 = inlined_call_operand.vmem [shape: f32[16,16], index: 0, kind: input, shape index: {}]
  %s1 = inlined_call_operand.vmem [shape: f32[16,16,64], index: 1, kind: input, shape index: {}]
  %s2 = inlined_call_operand.hbm [shape: s32[16,16], index: 2, kind: output, shape index: {}]
  %s3 = sld [smem:[#allocation0]]
  $region25: #{_uci_candidates.1} parent=0
    _
  %s5 = ssub.s32 1, %s3
  %s6 = scalar_select 0, %s5, %s3
  $region1: #{_uci_candidates.1} parent=0
    #allocation2 [shape = 'u8[8192]{0}', space=vmem, size = 0x2000, scoped, tag = 'output window, operand 0, single buffered']
    #allocation3 [shape = 's32[1]{0}', space=sflag, size = 0x4, scoped, tag = 'scoped memory for _uci_candidates.1']
    %7 = vsyncpa [#allocation3], 0
    // Predicated region
    $region2: #{_uci_candidates.1} parent=1 // pred_check
      _
    $region3: #{_uci_candidates.1} parent=1 // pred_check_branch
      %9 = sbr.rel (0) target = $region5
    $region4: #{_uci_candidates.1} parent=1 // pred_region
      _
    $region5: #{_uci_candidates.1} parent=1 // pred_fallthru
      _
    // Predicated region
    $region6: #{_uci_candidates.1} parent=1 // pred_check
      _
    $region7: #{_uci_candidates.1} parent=1 // pred_check_branch
      %11 = sbr.rel (0) target = $region9
    $region8: #{_uci_candidates.1} parent=1 // pred_region
      _
    $region9: #{_uci_candidates.1} parent=1 // pred_fallthru
      _
    loop: start=0, step=1, limit=2
    $region10: #{_uci_candidates.1} parent=1 // loop_pre_header
      _
    $region11: #{_uci_candidates.1} parent=1 // loop_header
      %s13 = sphi 0, %s17
      %p14 = scmp.ge.s32.totalorder %s13, 2
    $region12: #{_uci_candidates.1} parent=1 // loop_header_branch
      %16 = sbr.rel (%p14) target = $region16
    $region13: #{_uci_candidates.1} parent=1 // loop_body
      %s18 = smul.u32 %s13, 8
      %v19 = vlaneseq
      %v20 = vand.u32 %v19, 127
      %s21 = scalar_lea.vmem %s0, %s18
      %v22 = vld [vmem:[%s21] sm:$0xff]
      %s23 = smul.u32 %s18, 16
      %s24 = scalar_lea.vmem %s1, %s23
      %v25 = vld [vmem:[%s24] sm:$0xff]
      %v26 = vld [vmem:[%s24 + $0x8] sm:$0xff]
      %v27 = vld [vmem:[%s24 + $0x10] sm:$0xff]
      %v28 = vld [vmem:[%s24 + $0x18] sm:$0xff]
      %v29 = vld [vmem:[%s24 + $0x20] sm:$0xff]
      %v30 = vld [vmem:[%s24 + $0x28] sm:$0xff]
      %v31 = vld [vmem:[%s24 + $0x30] sm:$0xff]
      %v32 = vld [vmem:[%s24 + $0x38] sm:$0xff]
      %v33 = vld [vmem:[%s24 + $0x40] sm:$0xff]
      %v34 = vld [vmem:[%s24 + $0x48] sm:$0xff]
      %v35 = vld [vmem:[%s24 + $0x50] sm:$0xff]
      %v36 = vld [vmem:[%s24 + $0x58] sm:$0xff]
      %v37 = vld [vmem:[%s24 + $0x60] sm:$0xff]
      %v38 = vld [vmem:[%s24 + $0x68] sm:$0xff]
      %v39 = vld [vmem:[%s24 + $0x70] sm:$0xff]
      %v40 = vld [vmem:[%s24 + $0x78] sm:$0xff]
      %vm41 = vcmask 523264
      %v42 = vsel %vm41, %v25, -inf
      %43 = vmax.xlane.f32.xlu0 %v42
      %v44 = vpop.xlane.xlu0 %43
      %v45 = vsel %vm41, %v26, -inf
      %46 = vmax.xlane.f32.xlu0 %v45
      %v47 = vpop.xlane.xlu0 %46
      %v48 = vsel %vm41, %v27, -inf
      %49 = vmax.xlane.f32.xlu0 %v48
      %v50 = vpop.xlane.xlu0 %49
      %v51 = vsel %vm41, %v28, -inf
      %52 = vmax.xlane.f32.xlu0 %v51
      %v53 = vpop.xlane.xlu0 %52
      %v54 = vsel %vm41, %v29, -inf
      %55 = vmax.xlane.f32.xlu0 %v54
      %v56 = vpop.xlane.xlu0 %55
      %v57 = vsel %vm41, %v30, -inf
      %58 = vmax.xlane.f32.xlu0 %v57
      %v59 = vpop.xlane.xlu0 %58
      %v60 = vsel %vm41, %v31, -inf
      %61 = vmax.xlane.f32.xlu0 %v60
      %v62 = vpop.xlane.xlu0 %61
      %v63 = vsel %vm41, %v32, -inf
      %64 = vmax.xlane.f32.xlu0 %v63
      %v65 = vpop.xlane.xlu0 %64
      %v66 = vsel %vm41, %v33, -inf
      %67 = vmax.xlane.f32.xlu0 %v66
      %v68 = vpop.xlane.xlu0 %67
      %v69 = vsel %vm41, %v34, -inf
      %70 = vmax.xlane.f32.xlu0 %v69
      %v71 = vpop.xlane.xlu0 %70
      %v72 = vsel %vm41, %v35, -inf
      %73 = vmax.xlane.f32.xlu0 %v72
      %v74 = vpop.xlane.xlu0 %73
      %v75 = vsel %vm41, %v36, -inf
      %76 = vmax.xlane.f32.xlu0 %v75
      %v77 = vpop.xlane.xlu0 %76
      %v78 = vsel %vm41, %v37, -inf
      %79 = vmax.xlane.f32.xlu0 %v78
      %v80 = vpop.xlane.xlu0 %79
      %v81 = vsel %vm41, %v38, -inf
      %82 = vmax.xlane.f32.xlu0 %v81
      %v83 = vpop.xlane.xlu0 %82
      %v84 = vsel %vm41, %v39, -inf
      %85 = vmax.xlane.f32.xlu0 %v84
      %v86 = vpop.xlane.xlu0 %85
      %v87 = vsel %vm41, %v40, -inf
      %88 = vmax.xlane.f32.xlu0 %v87
      %v89 = vpop.xlane.xlu0 %88
      %vm90 = vcmp.eq.f32.partialorder %v25, %v44
      %vm91 = vcmp.eq.f32.partialorder %v26, %v47
      %vm92 = vcmp.eq.f32.partialorder %v27, %v50
      %vm93 = vcmp.eq.f32.partialorder %v28, %v53
      %vm94 = vcmp.eq.f32.partialorder %v29, %v56
      %vm95 = vcmp.eq.f32.partialorder %v30, %v59
      %vm96 = vcmp.eq.f32.partialorder %v31, %v62
      %vm97 = vcmp.eq.f32.partialorder %v32, %v65
      %vm98 = vcmp.eq.f32.partialorder %v33, %v68
      %vm99 = vcmp.eq.f32.partialorder %v34, %v71
      %vm100 = vcmp.eq.f32.partialorder %v35, %v74
      %vm101 = vcmp.eq.f32.partialorder %v36, %v77
      %vm102 = vcmp.eq.f32.partialorder %v37, %v80
      %vm103 = vcmp.eq.f32.partialorder %v38, %v83
      %vm104 = vcmp.eq.f32.partialorder %v39, %v86
      %vm105 = vcmp.eq.f32.partialorder %v40, %v89
      %v106 = vsel %vm90, %v20, 64
      %v107 = vsel %vm91, %v20, 64
      %v108 = vsel %vm92, %v20, 64
      %v109 = vsel %vm93, %v20, 64
      %v110 = vsel %vm94, %v20, 64
      %v111 = vsel %vm95, %v20, 64
      %v112 = vsel %vm96, %v20, 64
      %v113 = vsel %vm97, %v20, 64
      %v114 = vsel %vm98, %v20, 64
      %v115 = vsel %vm99, %v20, 64
      %v116 = vsel %vm100, %v20, 64
      %v117 = vsel %vm101, %v20, 64
      %v118 = vsel %vm102, %v20, 64
      %v119 = vsel %vm103, %v20, 64
      %v120 = vsel %vm104, %v20, 64
      %v121 = vsel %vm105, %v20, 64
      %v122 = vsel %vm41, %v106, 2147483647
      %v123 = vand.u32 %v122, 65535
      %v124 = vshra.s32 %v122, 16
      %v125 = vcvt.s32.f32 %v123
      %v126 = vcvt.s32.f32 %v124
      %127 = vmin.xlane.f32.xlu0 %v126
      %v128 = vpop.xlane.xlu0 %127
      %vm129 = vcmp.eq.f32.partialorder %v126, %v128
      %v130 = vsel %vm129, %v125, inf
      %131 = vmin.xlane.f32.xlu0 %v130
      %v132 = vpop.xlane.xlu0 %131
      %v133 = vcvt.f32.s32 %v132
      %v134 = vcvt.f32.s32 %v128
      %v135 = vshll.u32 %v134, 16
      %v136 = vadd.s32 %v135, %v133
      %v137 = vsel %vm41, %v107, 2147483647
      %v138 = vand.u32 %v137, 65535
      %v139 = vshra.s32 %v137, 16
      %v140 = vcvt.s32.f32 %v138
      %v141 = vcvt.s32.f32 %v139
      %142 = vmin.xlane.f32.xlu0 %v141
      %v143 = vpop.xlane.xlu0 %142
      %vm144 = vcmp.eq.f32.partialorder %v141, %v143
      %v145 = vsel %vm144, %v140, inf
      %146 = vmin.xlane.f32.xlu0 %v145
      %v147 = vpop.xlane.xlu0 %146
      %v148 = vcvt.f32.s32 %v147
      %v149 = vcvt.f32.s32 %v143
      %v150 = vshll.u32 %v149, 16
      %v151 = vadd.s32 %v150, %v148
      %v152 = vsel %vm41, %v108, 2147483647
      %v153 = vand.u32 %v152, 65535
      %v154 = vshra.s32 %v152, 16
      %v155 = vcvt.s32.f32 %v153
      %v156 = vcvt.s32.f32 %v154
      %157 = vmin.xlane.f32.xlu0 %v156
      %v158 = vpop.xlane.xlu0 %157
      %vm159 = vcmp.eq.f32.partialorder %v156, %v158
      %v160 = vsel %vm159, %v155, inf
      %161 = vmin.xlane.f32.xlu0 %v160
      %v162 = vpop.xlane.xlu0 %161
      %v163 = vcvt.f32.s32 %v162
      %v164 = vcvt.f32.s32 %v158
      %v165 = vshll.u32 %v164, 16
      %v166 = vadd.s32 %v165, %v163
      %v167 = vsel %vm41, %v109, 2147483647
      %v168 = vand.u32 %v167, 65535
      %v169 = vshra.s32 %v167, 16
      %v170 = vcvt.s32.f32 %v168
      %v171 = vcvt.s32.f32 %v169
      %172 = vmin.xlane.f32.xlu0 %v171
      %v173 = vpop.xlane.xlu0 %172
      %vm174 = vcmp.eq.f32.partialorder %v171, %v173
      %v175 = vsel %vm174, %v170, inf
      %176 = vmin.xlane.f32.xlu0 %v175
      %v177 = vpop.xlane.xlu0 %176
      %v178 = vcvt.f32.s32 %v177
      %v179 = vcvt.f32.s32 %v173
      %v180 = vshll.u32 %v179, 16
      %v181 = vadd.s32 %v180, %v178
      %v182 = vsel %vm41, %v110, 2147483647
      %v183 = vand.u32 %v182, 65535
      %v184 = vshra.s32 %v182, 16
      %v185 = vcvt.s32.f32 %v183
      %v186 = vcvt.s32.f32 %v184
      %187 = vmin.xlane.f32.xlu0 %v186
      %v188 = vpop.xlane.xlu0 %187
      %vm189 = vcmp.eq.f32.partialorder %v186, %v188
      %v190 = vsel %vm189, %v185, inf
      %191 = vmin.xlane.f32.xlu0 %v190
      %v192 = vpop.xlane.xlu0 %191
      %v193 = vcvt.f32.s32 %v192
      %v194 = vcvt.f32.s32 %v188
      %v195 = vshll.u32 %v194, 16
      %v196 = vadd.s32 %v195, %v193
      %v197 = vsel %vm41, %v111, 2147483647
      %v198 = vand.u32 %v197, 65535
      %v199 = vshra.s32 %v197, 16
      %v200 = vcvt.s32.f32 %v198
      %v201 = vcvt.s32.f32 %v199
      %202 = vmin.xlane.f32.xlu0 %v201
      %v203 = vpop.xlane.xlu0 %202
      %vm204 = vcmp.eq.f32.partialorder %v201, %v203
      %v205 = vsel %vm204, %v200, inf
      %206 = vmin.xlane.f32.xlu0 %v205
      %v207 = vpop.xlane.xlu0 %206
      %v208 = vcvt.f32.s32 %v207
      %v209 = vcvt.f32.s32 %v203
      %v210 = vshll.u32 %v209, 16
      %v211 = vadd.s32 %v210, %v208
      %v212 = vsel %vm41, %v112, 2147483647
      %v213 = vand.u32 %v212, 65535
      %v214 = vshra.s32 %v212, 16
      %v215 = vcvt.s32.f32 %v213
      %v216 = vcvt.s32.f32 %v214
      %217 = vmin.xlane.f32.xlu0 %v216
      %v218 = vpop.xlane.xlu0 %217
      %vm219 = vcmp.eq.f32.partialorder %v216, %v218
      %v220 = vsel %vm219, %v215, inf
      %221 = vmin.xlane.f32.xlu0 %v220
      %v222 = vpop.xlane.xlu0 %221
      %v223 = vcvt.f32.s32 %v222
      %v224 = vcvt.f32.s32 %v218
      %v225 = vshll.u32 %v224, 16
      %v226 = vadd.s32 %v225, %v223
      %v227 = vsel %vm41, %v113, 2147483647
      %v228 = vand.u32 %v227, 65535
      %v229 = vshra.s32 %v227, 16
      %v230 = vcvt.s32.f32 %v228
      %v231 = vcvt.s32.f32 %v229
      %232 = vmin.xlane.f32.xlu0 %v231
      %v233 = vpop.xlane.xlu0 %232
      %vm234 = vcmp.eq.f32.partialorder %v231, %v233
      %v235 = vsel %vm234, %v230, inf
      %236 = vmin.xlane.f32.xlu0 %v235
      %v237 = vpop.xlane.xlu0 %236
      %v238 = vcvt.f32.s32 %v237
      %v239 = vcvt.f32.s32 %v233
      %v240 = vshll.u32 %v239, 16
      %v241 = vadd.s32 %v240, %v238
      %v242 = vsel %vm41, %v114, 2147483647
      %v243 = vand.u32 %v242, 65535
      %v244 = vshra.s32 %v242, 16
      %v245 = vcvt.s32.f32 %v243
      %v246 = vcvt.s32.f32 %v244
      %247 = vmin.xlane.f32.xlu0 %v246
      %v248 = vpop.xlane.xlu0 %247
      %vm249 = vcmp.eq.f32.partialorder %v246, %v248
      %v250 = vsel %vm249, %v245, inf
      %251 = vmin.xlane.f32.xlu0 %v250
      %v252 = vpop.xlane.xlu0 %251
      %v253 = vcvt.f32.s32 %v252
      %v254 = vcvt.f32.s32 %v248
      %v255 = vshll.u32 %v254, 16
      %v256 = vadd.s32 %v255, %v253
      %v257 = vsel %vm41, %v115, 2147483647
      %v258 = vand.u32 %v257, 65535
      %v259 = vshra.s32 %v257, 16
      %v260 = vcvt.s32.f32 %v258
      %v261 = vcvt.s32.f32 %v259
      %262 = vmin.xlane.f32.xlu0 %v261
      %v263 = vpop.xlane.xlu0 %262
      %vm264 = vcmp.eq.f32.partialorder %v261, %v263
      %v265 = vsel %vm264, %v260, inf
      %266 = vmin.xlane.f32.xlu0 %v265
      %v267 = vpop.xlane.xlu0 %266
      %v268 = vcvt.f32.s32 %v267
      %v269 = vcvt.f32.s32 %v263
      %v270 = vshll.u32 %v269, 16
      %v271 = vadd.s32 %v270, %v268
      %v272 = vsel %vm41, %v116, 2147483647
      %v273 = vand.u32 %v272, 65535
      %v274 = vshra.s32 %v272, 16
      %v275 = vcvt.s32.f32 %v273
      %v276 = vcvt.s32.f32 %v274
      %277 = vmin.xlane.f32.xlu0 %v276
      %v278 = vpop.xlane.xlu0 %277
      %vm279 = vcmp.eq.f32.partialorder %v276, %v278
      %v280 = vsel %vm279, %v275, inf
      %281 = vmin.xlane.f32.xlu0 %v280
      %v282 = vpop.xlane.xlu0 %281
      %v283 = vcvt.f32.s32 %v282
      %v284 = vcvt.f32.s32 %v278
      %v285 = vshll.u32 %v284, 16
      %v286 = vadd.s32 %v285, %v283
      %v287 = vsel %vm41, %v117, 2147483647
      %v288 = vand.u32 %v287, 65535
      %v289 = vshra.s32 %v287, 16
      %v290 = vcvt.s32.f32 %v288
      %v291 = vcvt.s32.f32 %v289
      %292 = vmin.xlane.f32.xlu0 %v291
      %v293 = vpop.xlane.xlu0 %292
      %vm294 = vcmp.eq.f32.partialorder %v291, %v293
      %v295 = vsel %vm294, %v290, inf
      %296 = vmin.xlane.f32.xlu0 %v295
      %v297 = vpop.xlane.xlu0 %296
      %v298 = vcvt.f32.s32 %v297
      %v299 = vcvt.f32.s32 %v293
      %v300 = vshll.u32 %v299, 16
      %v301 = vadd.s32 %v300, %v298
      %v302 = vsel %vm41, %v118, 2147483647
      %v303 = vand.u32 %v302, 65535
      %v304 = vshra.s32 %v302, 16
      %v305 = vcvt.s32.f32 %v303
      %v306 = vcvt.s32.f32 %v304
      %307 = vmin.xlane.f32.xlu0 %v306
      %v308 = vpop.xlane.xlu0 %307
      %vm309 = vcmp.eq.f32.partialorder %v306, %v308
      %v310 = vsel %vm309, %v305, inf
      %311 = vmin.xlane.f32.xlu0 %v310
      %v312 = vpop.xlane.xlu0 %311
      %v313 = vcvt.f32.s32 %v312
      %v314 = vcvt.f32.s32 %v308
      %v315 = vshll.u32 %v314, 16
      %v316 = vadd.s32 %v315, %v313
      %v317 = vsel %vm41, %v119, 2147483647
      %v318 = vand.u32 %v317, 65535
      %v319 = vshra.s32 %v317, 16
      %v320 = vcvt.s32.f32 %v318
      %v321 = vcvt.s32.f32 %v319
      %322 = vmin.xlane.f32.xlu0 %v321
      %v323 = vpop.xlane.xlu0 %322
      %vm324 = vcmp.eq.f32.partialorder %v321, %v323
      %v325 = vsel %vm324, %v320, inf
      %326 = vmin.xlane.f32.xlu0 %v325
      %v327 = vpop.xlane.xlu0 %326
      %v328 = vcvt.f32.s32 %v327
      %v329 = vcvt.f32.s32 %v323
      %v330 = vshll.u32 %v329, 16
      %v331 = vadd.s32 %v330, %v328
      %v332 = vsel %vm41, %v120, 2147483647
      %v333 = vand.u32 %v332, 65535
      %v334 = vshra.s32 %v332, 16
      %v335 = vcvt.s32.f32 %v333
      %v336 = vcvt.s32.f32 %v334
      %337 = vmin.xlane.f32.xlu0 %v336
      %v338 = vpop.xlane.xlu0 %337
      %vm339 = vcmp.eq.f32.partialorder %v336, %v338
      %v340 = vsel %vm339, %v335, inf
      %341 = vmin.xlane.f32.xlu0 %v340
      %v342 = vpop.xlane.xlu0 %341
      %v343 = vcvt.f32.s32 %v342
      %v344 = vcvt.f32.s32 %v338
      %v345 = vshll.u32 %v344, 16
      %v346 = vadd.s32 %v345, %v343
      %v347 = vsel %vm41, %v121, 2147483647
      %v348 = vand.u32 %v347, 65535
      %v349 = vshra.s32 %v347, 16
      %v350 = vcvt.s32.f32 %v348
      %v351 = vcvt.s32.f32 %v349
      %352 = vmin.xlane.f32.xlu0 %v351
      %v353 = vpop.xlane.xlu0 %352
      %vm354 = vcmp.eq.f32.partialorder %v351, %v353
      %v355 = vsel %vm354, %v350, inf
      %356 = vmin.xlane.f32.xlu0 %v355
      %v357 = vpop.xlane.xlu0 %356
      %v358 = vcvt.f32.s32 %v357
      %v359 = vcvt.f32.s32 %v353
      %v360 = vshll.u32 %v359, 16
      %v361 = vadd.s32 %v360, %v358
      %vm362 = vcmask 130048
      %v363 = vsel %vm362, %v22, -inf
      %364 = vmax.xlane.f32.xlu0 %v363
      %v365 = vpop.xlane.xlu0 %364
      %vm366 = vcmp.eq.f32.partialorder %v22, %v365
      %v367 = vsel %vm366, %v20, 16
      %v368 = vsel %vm362, %v367, 2147483647
      %v369 = vand.u32 %v368, 65535
      %v370 = vshra.s32 %v368, 16
      %v371 = vcvt.s32.f32 %v369
      %v372 = vcvt.s32.f32 %v370
      %373 = vmin.xlane.f32.xlu0 %v372
      %v374 = vpop.xlane.xlu0 %373
      %vm375 = vcmp.eq.f32.partialorder %v372, %v374
      %v376 = vsel %vm375, %v371, inf
      %377 = vmin.xlane.f32.xlu0 %v376
      %v378 = vpop.xlane.xlu0 %377
      %v379 = vcvt.f32.s32 %v378
      %v380 = vcvt.f32.s32 %v374
      %v381 = vshll.u32 %v380, 16
      %v382 = vadd.s32 %v381, %v379
      %vm383 = vcmp.eq.s32.totalorder %v20, %v382
      %v384 = vlaneseq
      %v385 = vshrl.u32 %v384, 7
      %v386 = vsub.s32 %v20, %v385
      %v387 = vrot.slane %v136, %v386
      %v388 = vadd.s32 %v20, 4294967288
      %v389 = vlaneseq
      %v390 = vshrl.u32 %v389, 7
      %v391 = vsub.s32 %v388, %v390
      %v392 = vrot.slane %v151, %v391
      %vm393 = vcmask 130112
      %v394 = vsel %vm393, %v392, %v387
      %v395 = vlaneseq
      %v396 = vshrl.u32 %v395, 7
      %v397 = vsub.s32 %v20, %v396
      %v398 = vrot.slane %v166, %v397
      %v399 = vlaneseq
      %v400 = vshrl.u32 %v399, 7
      %v401 = vsub.s32 %v388, %v400
      %v402 = vrot.slane %v181, %v401
      %v403 = vsel %vm393, %v402, %v398
      %v404 = vlaneseq
      %v405 = vshrl.u32 %v404, 7
      %v406 = vsub.s32 %v20, %v405
      %v407 = vrot.slane %v196, %v406
      %v408 = vlaneseq
      %v409 = vshrl.u32 %v408, 7
      %v410 = vsub.s32 %v388, %v409
      %v411 = vrot.slane %v211, %v410
      %v412 = vsel %vm393, %v411, %v407
      %v413 = vlaneseq
      %v414 = vshrl.u32 %v413, 7
      %v415 = vsub.s32 %v20, %v414
      %v416 = vrot.slane %v226, %v415
      %v417 = vlaneseq
      %v418 = vshrl.u32 %v417, 7
      %v419 = vsub.s32 %v388, %v418
      %v420 = vrot.slane %v241, %v419
      %v421 = vsel %vm393, %v420, %v416
      %v422 = vlaneseq
      %v423 = vshrl.u32 %v422, 7
      %v424 = vsub.s32 %v20, %v423
      %v425 = vrot.slane %v256, %v424
      %v426 = vlaneseq
      %v427 = vshrl.u32 %v426, 7
      %v428 = vsub.s32 %v388, %v427
      %v429 = vrot.slane %v271, %v428
      %v430 = vsel %vm393, %v429, %v425
      %v431 = vlaneseq
      %v432 = vshrl.u32 %v431, 7
      %v433 = vsub.s32 %v20, %v432
      %v434 = vrot.slane %v286, %v433
      %v435 = vlaneseq
      %v436 = vshrl.u32 %v435, 7
      %v437 = vsub.s32 %v388, %v436
      %v438 = vrot.slane %v301, %v437
      %v439 = vsel %vm393, %v438, %v434
      %v440 = vlaneseq
      %v441 = vshrl.u32 %v440, 7
      %v442 = vsub.s32 %v20, %v441
      %v443 = vrot.slane %v316, %v442
      %v444 = vlaneseq
      %v445 = vshrl.u32 %v444, 7
      %v446 = vsub.s32 %v388, %v445
      %v447 = vrot.slane %v331, %v446
      %v448 = vsel %vm393, %v447, %v443
      %v449 = vlaneseq
      %v450 = vshrl.u32 %v449, 7
      %v451 = vsub.s32 %v20, %v450
      %v452 = vrot.slane %v346, %v451
      %v453 = vlaneseq
      %v454 = vshrl.u32 %v453, 7
      %v455 = vsub.s32 %v388, %v454
      %v456 = vrot.slane %v361, %v455
      %v457 = vsel %vm393, %v456, %v452
      %vm458 = vcmask 1041409
      %v459 = vsel %vm458, %v403, %v394
      %vm460 = vcmask 1042434
      %v461 = vsel %vm460, %v412, %v459
      %vm462 = vcmask 1043459
      %v463 = vsel %vm462, %v421, %v461
      %vm464 = vcmask 1044484
      %v465 = vsel %vm464, %v430, %v463
      %vm466 = vcmask 1045509
      %v467 = vsel %vm466, %v439, %v465
      %vm468 = vcmask 1046534
      %v469 = vsel %vm468, %v448, %v467
      %vm470 = vcmask 1047559
      %v471 = vsel %vm470, %v457, %v469
      %v472 = vsel %vm383, %v471, 0
      %v473 = vsel %vm362, %v472, 0
      %v474 = vand.u32 %v473, 65535
      %v475 = vshrl.u32 %v473, 16
      %v476 = vcvt.s32.f32 %v474
      %v477 = vcvt.s32.f32 %v475
      %478 = vadd.xlane.f32.xlu0 %v476
      %v479 = vpop.xlane.xlu0 %478
      %480 = vadd.xlane.f32.xlu0 %v477
      %v481 = vpop.xlane.xlu0 %480
      %v482 = vcvt.f32.s32 %v479
      %v483 = vcvt.f32.s32 %v481
      %v484 = vshll.u32 %v483, 16
      %v485 = vadd.s32 %v484, %v482
      %v486 = vshll.u32 %v382, 8
      %v487 = vshra.s32 %v485, 3
      %v488 = vshll.u32 %v487, 4
      %v489 = vor.u32 %v486, %v488
      %v490 = vand.u32 %v485, 7
      %v491 = vor.u32 %v489, %v490
      %vm492 = vcmp.eq.s32.totalorder %v20, 0
      %v493 = vsel %vm492, %v491, 0
      %v494 = vsel %vm383, -1.0, %v22
      %v495 = vsel %vm362, %v494, -inf
      %496 = vmax.xlane.f32.xlu0 %v495
      %v497 = vpop.xlane.xlu0 %496
      %vm498 = vcmp.eq.f32.partialorder %v494, %v497
      %v499 = vsel %vm498, %v20, 16
      %v500 = vsel %vm362, %v499, 2147483647
      %v501 = vand.u32 %v500, 65535
      %v502 = vshra.s32 %v500, 16
      %v503 = vcvt.s32.f32 %v501
      %v504 = vcvt.s32.f32 %v502
      %505 = vmin.xlane.f32.xlu0 %v504
      %v506 = vpop.xlane.xlu0 %505
      %vm507 = vcmp.eq.f32.partialorder %v504, %v506
      %v508 = vsel %vm507, %v503, inf
      %509 = vmin.xlane.f32.xlu0 %v508
      %v510 = vpop.xlane.xlu0 %509
      %v511 = vcvt.f32.s32 %v510
      %v512 = vcvt.f32.s32 %v506
      %v513 = vshll.u32 %v512, 16
      %v514 = vadd.s32 %v513, %v511
      %vm515 = vcmp.eq.s32.totalorder %v20, %v514
      %v516 = vsel %vm515, %v471, 0
      %v517 = vsel %vm362, %v516, 0
      %v518 = vand.u32 %v517, 65535
      %v519 = vshrl.u32 %v517, 16
      %v520 = vcvt.s32.f32 %v518
      %v521 = vcvt.s32.f32 %v519
      %522 = vadd.xlane.f32.xlu0 %v520
      %v523 = vpop.xlane.xlu0 %522
      %524 = vadd.xlane.f32.xlu0 %v521
      %v525 = vpop.xlane.xlu0 %524
      %v526 = vcvt.f32.s32 %v523
      %v527 = vcvt.f32.s32 %v525
      %v528 = vshll.u32 %v527, 16
      %v529 = vadd.s32 %v528, %v526
      %v530 = vshll.u32 %v514, 8
      %v531 = vshra.s32 %v529, 3
      %v532 = vshll.u32 %v531, 4
      %v533 = vor.u32 %v530, %v532
      %v534 = vand.u32 %v529, 7
      %v535 = vor.u32 %v533, %v534
      %vm536 = vcmp.eq.s32.totalorder %v20, 1
      %v537 = vsel %vm536, %v535, %v493
      %v538 = vsel %vm515, -1.0, %v494
      %v539 = vsel %vm362, %v538, -inf
      %540 = vmax.xlane.f32.xlu0 %v539
      %v541 = vpop.xlane.xlu0 %540
      %vm542 = vcmp.eq.f32.partialorder %v538, %v541
      %v543 = vsel %vm542, %v20, 16
      %v544 = vsel %vm362, %v543, 2147483647
      %v545 = vand.u32 %v544, 65535
      %v546 = vshra.s32 %v544, 16
      %v547 = vcvt.s32.f32 %v545
      %v548 = vcvt.s32.f32 %v546
      %549 = vmin.xlane.f32.xlu0 %v548
      %v550 = vpop.xlane.xlu0 %549
      %vm551 = vcmp.eq.f32.partialorder %v548, %v550
      %v552 = vsel %vm551, %v547, inf
      %553 = vmin.xlane.f32.xlu0 %v552
      %v554 = vpop.xlane.xlu0 %553
      %v555 = vcvt.f32.s32 %v554
      %v556 = vcvt.f32.s32 %v550
      %v557 = vshll.u32 %v556, 16
      %v558 = vadd.s32 %v557, %v555
      %vm559 = vcmp.eq.s32.totalorder %v20, %v558
      %v560 = vsel %vm559, %v471, 0
      %v561 = vsel %vm362, %v560, 0
      %v562 = vand.u32 %v561, 65535
      %v563 = vshrl.u32 %v561, 16
      %v564 = vcvt.s32.f32 %v562
      %v565 = vcvt.s32.f32 %v563
      %566 = vadd.xlane.f32.xlu0 %v564
      %v567 = vpop.xlane.xlu0 %566
      %568 = vadd.xlane.f32.xlu0 %v565
      %v569 = vpop.xlane.xlu0 %568
      %v570 = vcvt.f32.s32 %v567
      %v571 = vcvt.f32.s32 %v569
      %v572 = vshll.u32 %v571, 16
      %v573 = vadd.s32 %v572, %v570
      %v574 = vshll.u32 %v558, 8
      %v575 = vshra.s32 %v573, 3
      %v576 = vshll.u32 %v575, 4
      %v577 = vor.u32 %v574, %v576
      %v578 = vand.u32 %v573, 7
      %v579 = vor.u32 %v577, %v578
      %vm580 = vcmp.eq.s32.totalorder %v20, 2
      %v581 = vsel %vm580, %v579, %v537
      %v582 = vsel %vm559, -1.0, %v538
      %v583 = vsel %vm362, %v582, -inf
      %584 = vmax.xlane.f32.xlu0 %v583
      %v585 = vpop.xlane.xlu0 %584
      %vm586 = vcmp.eq.f32.partialorder %v582, %v585
      %v587 = vsel %vm586, %v20, 16
      %v588 = vsel %vm362, %v587, 2147483647
      %v589 = vand.u32 %v588, 65535
      %v590 = vshra.s32 %v588, 16
      %v591 = vcvt.s32.f32 %v589
      %v592 = vcvt.s32.f32 %v590
      %593 = vmin.xlane.f32.xlu0 %v592
      %v594 = vpop.xlane.xlu0 %593
      %vm595 = vcmp.eq.f32.partialorder %v592, %v594
      %v596 = vsel %vm595, %v591, inf
      %597 = vmin.xlane.f32.xlu0 %v596
      %v598 = vpop.xlane.xlu0 %597
      %v599 = vcvt.f32.s32 %v598
      %v600 = vcvt.f32.s32 %v594
      %v601 = vshll.u32 %v600, 16
      %v602 = vadd.s32 %v601, %v599
      %vm603 = vcmp.eq.s32.totalorder %v20, %v602
      %v604 = vsel %vm603, %v471, 0
      %v605 = vsel %vm362, %v604, 0
      %v606 = vand.u32 %v605, 65535
      %v607 = vshrl.u32 %v605, 16
      %v608 = vcvt.s32.f32 %v606
      %v609 = vcvt.s32.f32 %v607
      %610 = vadd.xlane.f32.xlu0 %v608
      %v611 = vpop.xlane.xlu0 %610
      %612 = vadd.xlane.f32.xlu0 %v609
      %v613 = vpop.xlane.xlu0 %612
      %v614 = vcvt.f32.s32 %v611
      %v615 = vcvt.f32.s32 %v613
      %v616 = vshll.u32 %v615, 16
      %v617 = vadd.s32 %v616, %v614
      %v618 = vshll.u32 %v602, 8
      %v619 = vshra.s32 %v617, 3
      %v620 = vshll.u32 %v619, 4
      %v621 = vor.u32 %v618, %v620
      %v622 = vand.u32 %v617, 7
      %v623 = vor.u32 %v621, %v622
      %vm624 = vcmp.eq.s32.totalorder %v20, 3
      %v625 = vsel %vm624, %v623, %v581
      %v626 = vsel %vm603, -1.0, %v582
      %v627 = vsel %vm362, %v626, -inf
      %628 = vmax.xlane.f32.xlu0 %v627
      %v629 = vpop.xlane.xlu0 %628
      %vm630 = vcmp.eq.f32.partialorder %v626, %v629
      %v631 = vsel %vm630, %v20, 16
      %v632 = vsel %vm362, %v631, 2147483647
      %v633 = vand.u32 %v632, 65535
      %v634 = vshra.s32 %v632, 16
      %v635 = vcvt.s32.f32 %v633
      %v636 = vcvt.s32.f32 %v634
      %637 = vmin.xlane.f32.xlu0 %v636
      %v638 = vpop.xlane.xlu0 %637
      %vm639 = vcmp.eq.f32.partialorder %v636, %v638
      %v640 = vsel %vm639, %v635, inf
      %641 = vmin.xlane.f32.xlu0 %v640
      %v642 = vpop.xlane.xlu0 %641
      %v643 = vcvt.f32.s32 %v642
      %v644 = vcvt.f32.s32 %v638
      %v645 = vshll.u32 %v644, 16
      %v646 = vadd.s32 %v645, %v643
      %vm647 = vcmp.eq.s32.totalorder %v20, %v646
      %v648 = vsel %vm647, %v471, 0
      %v649 = vsel %vm362, %v648, 0
      %v650 = vand.u32 %v649, 65535
      %v651 = vshrl.u32 %v649, 16
      %v652 = vcvt.s32.f32 %v650
      %v653 = vcvt.s32.f32 %v651
      %654 = vadd.xlane.f32.xlu0 %v652
      %v655 = vpop.xlane.xlu0 %654
      %656 = vadd.xlane.f32.xlu0 %v653
      %v657 = vpop.xlane.xlu0 %656
      %v658 = vcvt.f32.s32 %v655
      %v659 = vcvt.f32.s32 %v657
      %v660 = vshll.u32 %v659, 16
      %v661 = vadd.s32 %v660, %v658
      %v662 = vshll.u32 %v646, 8
      %v663 = vshra.s32 %v661, 3
      %v664 = vshll.u32 %v663, 4
      %v665 = vor.u32 %v662, %v664
      %v666 = vand.u32 %v661, 7
      %v667 = vor.u32 %v665, %v666
      %vm668 = vcmp.eq.s32.totalorder %v20, 4
      %v669 = vsel %vm668, %v667, %v625
      %v670 = vsel %vm647, -1.0, %v626
      %v671 = vsel %vm362, %v670, -inf
      %672 = vmax.xlane.f32.xlu0 %v671
      %v673 = vpop.xlane.xlu0 %672
      %vm674 = vcmp.eq.f32.partialorder %v670, %v673
      %v675 = vsel %vm674, %v20, 16
      %v676 = vsel %vm362, %v675, 2147483647
      %v677 = vand.u32 %v676, 65535
      %v678 = vshra.s32 %v676, 16
      %v679 = vcvt.s32.f32 %v677
      %v680 = vcvt.s32.f32 %v678
      %681 = vmin.xlane.f32.xlu0 %v680
      %v682 = vpop.xlane.xlu0 %681
      %vm683 = vcmp.eq.f32.partialorder %v680, %v682
      %v684 = vsel %vm683, %v679, inf
      %685 = vmin.xlane.f32.xlu0 %v684
      %v686 = vpop.xlane.xlu0 %685
      %v687 = vcvt.f32.s32 %v686
      %v688 = vcvt.f32.s32 %v682
      %v689 = vshll.u32 %v688, 16
      %v690 = vadd.s32 %v689, %v687
      %vm691 = vcmp.eq.s32.totalorder %v20, %v690
      %v692 = vsel %vm691, %v471, 0
      %v693 = vsel %vm362, %v692, 0
      %v694 = vand.u32 %v693, 65535
      %v695 = vshrl.u32 %v693, 16
      %v696 = vcvt.s32.f32 %v694
      %v697 = vcvt.s32.f32 %v695
      %698 = vadd.xlane.f32.xlu0 %v696
      %v699 = vpop.xlane.xlu0 %698
      %700 = vadd.xlane.f32.xlu0 %v697
      %v701 = vpop.xlane.xlu0 %700
      %v702 = vcvt.f32.s32 %v699
      %v703 = vcvt.f32.s32 %v701
      %v704 = vshll.u32 %v703, 16
      %v705 = vadd.s32 %v704, %v702
      %v706 = vshll.u32 %v690, 8
      %v707 = vshra.s32 %v705, 3
      %v708 = vshll.u32 %v707, 4
      %v709 = vor.u32 %v706, %v708
      %v710 = vand.u32 %v705, 7
      %v711 = vor.u32 %v709, %v710
      %vm712 = vcmp.eq.s32.totalorder %v20, 5
      %v713 = vsel %vm712, %v711, %v669
      %v714 = vsel %vm691, -1.0, %v670
      %v715 = vsel %vm362, %v714, -inf
      %716 = vmax.xlane.f32.xlu0 %v715
      %v717 = vpop.xlane.xlu0 %716
      %vm718 = vcmp.eq.f32.partialorder %v714, %v717
      %v719 = vsel %vm718, %v20, 16
      %v720 = vsel %vm362, %v719, 2147483647
      %v721 = vand.u32 %v720, 65535
      %v722 = vshra.s32 %v720, 16
      %v723 = vcvt.s32.f32 %v721
      %v724 = vcvt.s32.f32 %v722
      %725 = vmin.xlane.f32.xlu0 %v724
      %v726 = vpop.xlane.xlu0 %725
      %vm727 = vcmp.eq.f32.partialorder %v724, %v726
      %v728 = vsel %vm727, %v723, inf
      %729 = vmin.xlane.f32.xlu0 %v728
      %v730 = vpop.xlane.xlu0 %729
      %v731 = vcvt.f32.s32 %v730
      %v732 = vcvt.f32.s32 %v726
      %v733 = vshll.u32 %v732, 16
      %v734 = vadd.s32 %v733, %v731
      %vm735 = vcmp.eq.s32.totalorder %v20, %v734
      %v736 = vsel %vm735, %v471, 0
      %v737 = vsel %vm362, %v736, 0
      %v738 = vand.u32 %v737, 65535
      %v739 = vshrl.u32 %v737, 16
      %v740 = vcvt.s32.f32 %v738
      %v741 = vcvt.s32.f32 %v739
      %742 = vadd.xlane.f32.xlu0 %v740
      %v743 = vpop.xlane.xlu0 %742
      %744 = vadd.xlane.f32.xlu0 %v741
      %v745 = vpop.xlane.xlu0 %744
      %v746 = vcvt.f32.s32 %v743
      %v747 = vcvt.f32.s32 %v745
      %v748 = vshll.u32 %v747, 16
      %v749 = vadd.s32 %v748, %v746
      %v750 = vshll.u32 %v734, 8
      %v751 = vshra.s32 %v749, 3
      %v752 = vshll.u32 %v751, 4
      %v753 = vor.u32 %v750, %v752
      %v754 = vand.u32 %v749, 7
      %v755 = vor.u32 %v753, %v754
      %vm756 = vcmp.eq.s32.totalorder %v20, 6
      %v757 = vsel %vm756, %v755, %v713
      %v758 = vsel %vm735, -1.0, %v714
      %v759 = vsel %vm362, %v758, -inf
      %760 = vmax.xlane.f32.xlu0 %v759
      %v761 = vpop.xlane.xlu0 %760
      %vm762 = vcmp.eq.f32.partialorder %v758, %v761
      %v763 = vsel %vm762, %v20, 16
      %v764 = vsel %vm362, %v763, 2147483647
      %v765 = vand.u32 %v764, 65535
      %v766 = vshra.s32 %v764, 16
      %v767 = vcvt.s32.f32 %v765
      %v768 = vcvt.s32.f32 %v766
      %769 = vmin.xlane.f32.xlu0 %v768
      %v770 = vpop.xlane.xlu0 %769
      %vm771 = vcmp.eq.f32.partialorder %v768, %v770
      %v772 = vsel %vm771, %v767, inf
      %773 = vmin.xlane.f32.xlu0 %v772
      %v774 = vpop.xlane.xlu0 %773
      %v775 = vcvt.f32.s32 %v774
      %v776 = vcvt.f32.s32 %v770
      %v777 = vshll.u32 %v776, 16
      %v778 = vadd.s32 %v777, %v775
      %vm779 = vcmp.eq.s32.totalorder %v20, %v778
      %v780 = vsel %vm779, %v471, 0
      %v781 = vsel %vm362, %v780, 0
      %v782 = vand.u32 %v781, 65535
      %v783 = vshrl.u32 %v781, 16
      %v784 = vcvt.s32.f32 %v782
      %v785 = vcvt.s32.f32 %v783
      %786 = vadd.xlane.f32.xlu0 %v784
      %v787 = vpop.xlane.xlu0 %786
      %788 = vadd.xlane.f32.xlu0 %v785
      %v789 = vpop.xlane.xlu0 %788
      %v790 = vcvt.f32.s32 %v787
      %v791 = vcvt.f32.s32 %v789
      %v792 = vshll.u32 %v791, 16
      %v793 = vadd.s32 %v792, %v790
      %v794 = vshll.u32 %v778, 8
      %v795 = vshra.s32 %v793, 3
      %v796 = vshll.u32 %v795, 4
      %v797 = vor.u32 %v794, %v796
      %v798 = vand.u32 %v793, 7
      %v799 = vor.u32 %v797, %v798
      %vm800 = vcmp.eq.s32.totalorder %v20, 7
      %v801 = vsel %vm800, %v799, %v757
      %v802 = vsel %vm779, -1.0, %v758
      %v803 = vsel %vm362, %v802, -inf
      %804 = vmax.xlane.f32.xlu0 %v803
      %v805 = vpop.xlane.xlu0 %804
      %vm806 = vcmp.eq.f32.partialorder %v802, %v805
      %v807 = vsel %vm806, %v20, 16
      %v808 = vsel %vm362, %v807, 2147483647
      %v809 = vand.u32 %v808, 65535
      %v810 = vshra.s32 %v808, 16
      %v811 = vcvt.s32.f32 %v809
      %v812 = vcvt.s32.f32 %v810
      %813 = vmin.xlane.f32.xlu0 %v812
      %v814 = vpop.xlane.xlu0 %813
      %vm815 = vcmp.eq.f32.partialorder %v812, %v814
      %v816 = vsel %vm815, %v811, inf
      %817 = vmin.xlane.f32.xlu0 %v816
      %v818 = vpop.xlane.xlu0 %817
      %v819 = vcvt.f32.s32 %v818
      %v820 = vcvt.f32.s32 %v814
      %v821 = vshll.u32 %v820, 16
      %v822 = vadd.s32 %v821, %v819
      %vm823 = vcmp.eq.s32.totalorder %v20, %v822
      %v824 = vsel %vm823, %v471, 0
      %v825 = vsel %vm362, %v824, 0
      %v826 = vand.u32 %v825, 65535
      %v827 = vshrl.u32 %v825, 16
      %v828 = vcvt.s32.f32 %v826
      %v829 = vcvt.s32.f32 %v827
      %830 = vadd.xlane.f32.xlu0 %v828
      %v831 = vpop.xlane.xlu0 %830
      %832 = vadd.xlane.f32.xlu0 %v829
      %v833 = vpop.xlane.xlu0 %832
      %v834 = vcvt.f32.s32 %v831
      %v835 = vcvt.f32.s32 %v833
      %v836 = vshll.u32 %v835, 16
      %v837 = vadd.s32 %v836, %v834
      %v838 = vshll.u32 %v822, 8
      %v839 = vshra.s32 %v837, 3
      %v840 = vshll.u32 %v839, 4
      %v841 = vor.u32 %v838, %v840
      %v842 = vand.u32 %v837, 7
      %v843 = vor.u32 %v841, %v842
      %vm844 = vcmp.eq.s32.totalorder %v20, 8
      %v845 = vsel %vm844, %v843, %v801
      %v846 = vsel %vm823, -1.0, %v802
      %v847 = vsel %vm362, %v846, -inf
      %848 = vmax.xlane.f32.xlu0 %v847
      %v849 = vpop.xlane.xlu0 %848
      %vm850 = vcmp.eq.f32.partialorder %v846, %v849
      %v851 = vsel %vm850, %v20, 16
      %v852 = vsel %vm362, %v851, 2147483647
      %v853 = vand.u32 %v852, 65535
      %v854 = vshra.s32 %v852, 16
      %v855 = vcvt.s32.f32 %v853
      %v856 = vcvt.s32.f32 %v854
      %857 = vmin.xlane.f32.xlu0 %v856
      %v858 = vpop.xlane.xlu0 %857
      %vm859 = vcmp.eq.f32.partialorder %v856, %v858
      %v860 = vsel %vm859, %v855, inf
      %861 = vmin.xlane.f32.xlu0 %v860
      %v862 = vpop.xlane.xlu0 %861
      %v863 = vcvt.f32.s32 %v862
      %v864 = vcvt.f32.s32 %v858
      %v865 = vshll.u32 %v864, 16
      %v866 = vadd.s32 %v865, %v863
      %vm867 = vcmp.eq.s32.totalorder %v20, %v866
      %v868 = vsel %vm867, %v471, 0
      %v869 = vsel %vm362, %v868, 0
      %v870 = vand.u32 %v869, 65535
      %v871 = vshrl.u32 %v869, 16
      %v872 = vcvt.s32.f32 %v870
      %v873 = vcvt.s32.f32 %v871
      %874 = vadd.xlane.f32.xlu0 %v872
      %v875 = vpop.xlane.xlu0 %874
      %876 = vadd.xlane.f32.xlu0 %v873
      %v877 = vpop.xlane.xlu0 %876
      %v878 = vcvt.f32.s32 %v875
      %v879 = vcvt.f32.s32 %v877
      %v880 = vshll.u32 %v879, 16
      %v881 = vadd.s32 %v880, %v878
      %v882 = vshll.u32 %v866, 8
      %v883 = vshra.s32 %v881, 3
      %v884 = vshll.u32 %v883, 4
      %v885 = vor.u32 %v882, %v884
      %v886 = vand.u32 %v881, 7
      %v887 = vor.u32 %v885, %v886
      %vm888 = vcmp.eq.s32.totalorder %v20, 9
      %v889 = vsel %vm888, %v887, %v845
      %v890 = vsel %vm867, -1.0, %v846
      %v891 = vsel %vm362, %v890, -inf
      %892 = vmax.xlane.f32.xlu0 %v891
      %v893 = vpop.xlane.xlu0 %892
      %vm894 = vcmp.eq.f32.partialorder %v890, %v893
      %v895 = vsel %vm894, %v20, 16
      %v896 = vsel %vm362, %v895, 2147483647
      %v897 = vand.u32 %v896, 65535
      %v898 = vshra.s32 %v896, 16
      %v899 = vcvt.s32.f32 %v897
      %v900 = vcvt.s32.f32 %v898
      %901 = vmin.xlane.f32.xlu0 %v900
      %v902 = vpop.xlane.xlu0 %901
      %vm903 = vcmp.eq.f32.partialorder %v900, %v902
      %v904 = vsel %vm903, %v899, inf
      %905 = vmin.xlane.f32.xlu0 %v904
      %v906 = vpop.xlane.xlu0 %905
      %v907 = vcvt.f32.s32 %v906
      %v908 = vcvt.f32.s32 %v902
      %v909 = vshll.u32 %v908, 16
      %v910 = vadd.s32 %v909, %v907
      %vm911 = vcmp.eq.s32.totalorder %v20, %v910
      %v912 = vsel %vm911, %v471, 0
      %v913 = vsel %vm362, %v912, 0
      %v914 = vand.u32 %v913, 65535
      %v915 = vshrl.u32 %v913, 16
      %v916 = vcvt.s32.f32 %v914
      %v917 = vcvt.s32.f32 %v915
      %918 = vadd.xlane.f32.xlu0 %v916
      %v919 = vpop.xlane.xlu0 %918
      %920 = vadd.xlane.f32.xlu0 %v917
      %v921 = vpop.xlane.xlu0 %920
      %v922 = vcvt.f32.s32 %v919
      %v923 = vcvt.f32.s32 %v921
      %v924 = vshll.u32 %v923, 16
      %v925 = vadd.s32 %v924, %v922
      %v926 = vshll.u32 %v910, 8
      %v927 = vshra.s32 %v925, 3
      %v928 = vshll.u32 %v927, 4
      %v929 = vor.u32 %v926, %v928
      %v930 = vand.u32 %v925, 7
      %v931 = vor.u32 %v929, %v930
      %vm932 = vcmp.eq.s32.totalorder %v20, 10
      %v933 = vsel %vm932, %v931, %v889
      %v934 = vsel %vm911, -1.0, %v890
      %v935 = vsel %vm362, %v934, -inf
      %936 = vmax.xlane.f32.xlu0 %v935
      %v937 = vpop.xlane.xlu0 %936
      %vm938 = vcmp.eq.f32.partialorder %v934, %v937
      %v939 = vsel %vm938, %v20, 16
      %v940 = vsel %vm362, %v939, 2147483647
      %v941 = vand.u32 %v940, 65535
      %v942 = vshra.s32 %v940, 16
      %v943 = vcvt.s32.f32 %v941
      %v944 = vcvt.s32.f32 %v942
      %945 = vmin.xlane.f32.xlu0 %v944
      %v946 = vpop.xlane.xlu0 %945
      %vm947 = vcmp.eq.f32.partialorder %v944, %v946
      %v948 = vsel %vm947, %v943, inf
      %949 = vmin.xlane.f32.xlu0 %v948
      %v950 = vpop.xlane.xlu0 %949
      %v951 = vcvt.f32.s32 %v950
      %v952 = vcvt.f32.s32 %v946
      %v953 = vshll.u32 %v952, 16
      %v954 = vadd.s32 %v953, %v951
      %vm955 = vcmp.eq.s32.totalorder %v20, %v954
      %v956 = vsel %vm955, %v471, 0
      %v957 = vsel %vm362, %v956, 0
      %v958 = vand.u32 %v957, 65535
      %v959 = vshrl.u32 %v957, 16
      %v960 = vcvt.s32.f32 %v958
      %v961 = vcvt.s32.f32 %v959
      %962 = vadd.xlane.f32.xlu0 %v960
      %v963 = vpop.xlane.xlu0 %962
      %964 = vadd.xlane.f32.xlu0 %v961
      %v965 = vpop.xlane.xlu0 %964
      %v966 = vcvt.f32.s32 %v963
      %v967 = vcvt.f32.s32 %v965
      %v968 = vshll.u32 %v967, 16
      %v969 = vadd.s32 %v968, %v966
      %v970 = vshll.u32 %v954, 8
      %v971 = vshra.s32 %v969, 3
      %v972 = vshll.u32 %v971, 4
      %v973 = vor.u32 %v970, %v972
      %v974 = vand.u32 %v969, 7
      %v975 = vor.u32 %v973, %v974
      %vm976 = vcmp.eq.s32.totalorder %v20, 11
      %v977 = vsel %vm976, %v975, %v933
      %v978 = vsel %vm955, -1.0, %v934
      %v979 = vsel %vm362, %v978, -inf
      %980 = vmax.xlane.f32.xlu0 %v979
      %v981 = vpop.xlane.xlu0 %980
      %vm982 = vcmp.eq.f32.partialorder %v978, %v981
      %v983 = vsel %vm982, %v20, 16
      %v984 = vsel %vm362, %v983, 2147483647
      %v985 = vand.u32 %v984, 65535
      %v986 = vshra.s32 %v984, 16
      %v987 = vcvt.s32.f32 %v985
      %v988 = vcvt.s32.f32 %v986
      %989 = vmin.xlane.f32.xlu0 %v988
      %v990 = vpop.xlane.xlu0 %989
      %vm991 = vcmp.eq.f32.partialorder %v988, %v990
      %v992 = vsel %vm991, %v987, inf
      %993 = vmin.xlane.f32.xlu0 %v992
      %v994 = vpop.xlane.xlu0 %993
      %v995 = vcvt.f32.s32 %v994
      %v996 = vcvt.f32.s32 %v990
      %v997 = vshll.u32 %v996, 16
      %v998 = vadd.s32 %v997, %v995
      %vm999 = vcmp.eq.s32.totalorder %v20, %v998
      %v1000 = vsel %vm999, %v471, 0
      %v1001 = vsel %vm362, %v1000, 0
      %v1002 = vand.u32 %v1001, 65535
      %v1003 = vshrl.u32 %v1001, 16
      %v1004 = vcvt.s32.f32 %v1002
      %v1005 = vcvt.s32.f32 %v1003
      %1006 = vadd.xlane.f32.xlu0 %v1004
      %v1007 = vpop.xlane.xlu0 %1006
      %1008 = vadd.xlane.f32.xlu0 %v1005
      %v1009 = vpop.xlane.xlu0 %1008
      %v1010 = vcvt.f32.s32 %v1007
      %v1011 = vcvt.f32.s32 %v1009
      %v1012 = vshll.u32 %v1011, 16
      %v1013 = vadd.s32 %v1012, %v1010
      %v1014 = vshll.u32 %v998, 8
      %v1015 = vshra.s32 %v1013, 3
      %v1016 = vshll.u32 %v1015, 4
      %v1017 = vor.u32 %v1014, %v1016
      %v1018 = vand.u32 %v1013, 7
      %v1019 = vor.u32 %v1017, %v1018
      %vm1020 = vcmp.eq.s32.totalorder %v20, 12
      %v1021 = vsel %vm1020, %v1019, %v977
      %v1022 = vsel %vm999, -1.0, %v978
      %v1023 = vsel %vm362, %v1022, -inf
      %1024 = vmax.xlane.f32.xlu0 %v1023
      %v1025 = vpop.xlane.xlu0 %1024
      %vm1026 = vcmp.eq.f32.partialorder %v1022, %v1025
      %v1027 = vsel %vm1026, %v20, 16
      %v1028 = vsel %vm362, %v1027, 2147483647
      %v1029 = vand.u32 %v1028, 65535
      %v1030 = vshra.s32 %v1028, 16
      %v1031 = vcvt.s32.f32 %v1029
      %v1032 = vcvt.s32.f32 %v1030
      %1033 = vmin.xlane.f32.xlu0 %v1032
      %v1034 = vpop.xlane.xlu0 %1033
      %vm1035 = vcmp.eq.f32.partialorder %v1032, %v1034
      %v1036 = vsel %vm1035, %v1031, inf
      %1037 = vmin.xlane.f32.xlu0 %v1036
      %v1038 = vpop.xlane.xlu0 %1037
      %v1039 = vcvt.f32.s32 %v1038
      %v1040 = vcvt.f32.s32 %v1034
      %v1041 = vshll.u32 %v1040, 16
      %v1042 = vadd.s32 %v1041, %v1039
      %vm1043 = vcmp.eq.s32.totalorder %v20, %v1042
      %v1044 = vsel %vm1043, %v471, 0
      %v1045 = vsel %vm362, %v1044, 0
      %v1046 = vand.u32 %v1045, 65535
      %v1047 = vshrl.u32 %v1045, 16
      %v1048 = vcvt.s32.f32 %v1046
      %v1049 = vcvt.s32.f32 %v1047
      %1050 = vadd.xlane.f32.xlu0 %v1048
      %v1051 = vpop.xlane.xlu0 %1050
      %1052 = vadd.xlane.f32.xlu0 %v1049
      %v1053 = vpop.xlane.xlu0 %1052
      %v1054 = vcvt.f32.s32 %v1051
      %v1055 = vcvt.f32.s32 %v1053
      %v1056 = vshll.u32 %v1055, 16
      %v1057 = vadd.s32 %v1056, %v1054
      %v1058 = vshll.u32 %v1042, 8
      %v1059 = vshra.s32 %v1057, 3
      %v1060 = vshll.u32 %v1059, 4
      %v1061 = vor.u32 %v1058, %v1060
      %v1062 = vand.u32 %v1057, 7
      %v1063 = vor.u32 %v1061, %v1062
      %vm1064 = vcmp.eq.s32.totalorder %v20, 13
      %v1065 = vsel %vm1064, %v1063, %v1021
      %v1066 = vsel %vm1043, -1.0, %v1022
      %v1067 = vsel %vm362, %v1066, -inf
      %1068 = vmax.xlane.f32.xlu0 %v1067
      %v1069 = vpop.xlane.xlu0 %1068
      %vm1070 = vcmp.eq.f32.partialorder %v1066, %v1069
      %v1071 = vsel %vm1070, %v20, 16
      %v1072 = vsel %vm362, %v1071, 2147483647
      %v1073 = vand.u32 %v1072, 65535
      %v1074 = vshra.s32 %v1072, 16
      %v1075 = vcvt.s32.f32 %v1073
      %v1076 = vcvt.s32.f32 %v1074
      %1077 = vmin.xlane.f32.xlu0 %v1076
      %v1078 = vpop.xlane.xlu0 %1077
      %vm1079 = vcmp.eq.f32.partialorder %v1076, %v1078
      %v1080 = vsel %vm1079, %v1075, inf
      %1081 = vmin.xlane.f32.xlu0 %v1080
      %v1082 = vpop.xlane.xlu0 %1081
      %v1083 = vcvt.f32.s32 %v1082
      %v1084 = vcvt.f32.s32 %v1078
      %v1085 = vshll.u32 %v1084, 16
      %v1086 = vadd.s32 %v1085, %v1083
      %vm1087 = vcmp.eq.s32.totalorder %v20, %v1086
      %v1088 = vsel %vm1087, %v471, 0
      %v1089 = vsel %vm362, %v1088, 0
      %v1090 = vand.u32 %v1089, 65535
      %v1091 = vshrl.u32 %v1089, 16
      %v1092 = vcvt.s32.f32 %v1090
      %v1093 = vcvt.s32.f32 %v1091
      %1094 = vadd.xlane.f32.xlu0 %v1092
      %v1095 = vpop.xlane.xlu0 %1094
      %1096 = vadd.xlane.f32.xlu0 %v1093
      %v1097 = vpop.xlane.xlu0 %1096
      %v1098 = vcvt.f32.s32 %v1095
      %v1099 = vcvt.f32.s32 %v1097
      %v1100 = vshll.u32 %v1099, 16
      %v1101 = vadd.s32 %v1100, %v1098
      %v1102 = vshll.u32 %v1086, 8
      %v1103 = vshra.s32 %v1101, 3
      %v1104 = vshll.u32 %v1103, 4
      %v1105 = vor.u32 %v1102, %v1104
      %v1106 = vand.u32 %v1101, 7
      %v1107 = vor.u32 %v1105, %v1106
      %vm1108 = vcmp.eq.s32.totalorder %v20, 14
      %v1109 = vsel %vm1108, %v1107, %v1065
      %v1110 = vsel %vm1087, -1.0, %v1066
      %v1111 = vsel %vm362, %v1110, -inf
      %1112 = vmax.xlane.f32.xlu0 %v1111
      %v1113 = vpop.xlane.xlu0 %1112
      %vm1114 = vcmp.eq.f32.partialorder %v1110, %v1113
      %v1115 = vsel %vm1114, %v20, 16
      %v1116 = vsel %vm362, %v1115, 2147483647
      %v1117 = vand.u32 %v1116, 65535
      %v1118 = vshra.s32 %v1116, 16
      %v1119 = vcvt.s32.f32 %v1117
      %v1120 = vcvt.s32.f32 %v1118
      %1121 = vmin.xlane.f32.xlu0 %v1120
      %v1122 = vpop.xlane.xlu0 %1121
      %vm1123 = vcmp.eq.f32.partialorder %v1120, %v1122
      %v1124 = vsel %vm1123, %v1119, inf
      %1125 = vmin.xlane.f32.xlu0 %v1124
      %v1126 = vpop.xlane.xlu0 %1125
      %v1127 = vcvt.f32.s32 %v1126
      %v1128 = vcvt.f32.s32 %v1122
      %v1129 = vshll.u32 %v1128, 16
      %v1130 = vadd.s32 %v1129, %v1127
      %vm1131 = vcmp.eq.s32.totalorder %v20, %v1130
      %v1132 = vsel %vm1131, %v471, 0
      %v1133 = vsel %vm362, %v1132, 0
      %v1134 = vand.u32 %v1133, 65535
      %v1135 = vshrl.u32 %v1133, 16
      %v1136 = vcvt.s32.f32 %v1134
      %v1137 = vcvt.s32.f32 %v1135
      %1138 = vadd.xlane.f32.xlu0 %v1136
      %v1139 = vpop.xlane.xlu0 %1138
      %1140 = vadd.xlane.f32.xlu0 %v1137
      %v1141 = vpop.xlane.xlu0 %1140
      %v1142 = vcvt.f32.s32 %v1139
      %v1143 = vcvt.f32.s32 %v1141
      %v1144 = vshll.u32 %v1143, 16
      %v1145 = vadd.s32 %v1144, %v1142
      %v1146 = vshll.u32 %v1130, 8
      %v1147 = vshra.s32 %v1145, 3
      %v1148 = vshll.u32 %v1147, 4
      %v1149 = vor.u32 %v1146, %v1148
      %v1150 = vand.u32 %v1145, 7
      %v1151 = vor.u32 %v1149, %v1150
      %vm1152 = vcmp.eq.s32.totalorder %v20, 15
      %v1153 = vsel %vm1152, %v1151, %v1109
      %s1154 = scalar_lea.vmem [#allocation2], %s18
      %1155 = vst.msk [vmem:[%s1154] sm:$0xff] %vm362, %v1153
    $region14: #{_uci_candidates.1} parent=1 // loop_footer
      %s17 = sadd.s32 1, %s13
    $region15: #{_uci_candidates.1} parent=1 // loop_footer_branch
      %12 = sbr.rel target = $region11
    $region16: #{_uci_candidates.1} parent=1 // loop_exit
      _
    // Predicated region
    $region17: #{_uci_candidates.1} parent=1 // pred_check
      _
    $region18: #{_uci_candidates.1} parent=1 // pred_check_branch
      %1157 = sbr.rel (0) target = $region20
    $region19: #{_uci_candidates.1} parent=1 // pred_region
      %s1159 = ssub.s32 256, 256
      %1160 = vsyncadd [#allocation3], %s1159
      %s1161 = sshll.u32 [#allocation2], 4
      %s1162 = int_to_ptr.vmem [resolvable:$true] %s1161
      %1167 = dma.vmem_to_hbm [thread:$0]  %s1162, 256, %s2, [#allocation3], 128, 128, 8
    $region20: #{_uci_candidates.1} parent=1 // pred_fallthru
      _
    // Predicated region
    $region21: #{_uci_candidates.1} parent=1 // pred_check
      _
    $region22: #{_uci_candidates.1} parent=1 // pred_check_branch
      %1169 = sbr.rel (0) target = $region24
    $region23: #{_uci_candidates.1} parent=1 // pred_region
      %1170 = dma.done [#allocation3], 256
    $region24: #{_uci_candidates.1} parent=1 // pred_fallthru
      _
    %1171 = vsyncpa [#allocation3], 1

</llo_original>
